<compile_context>
chip_gen: v6e
topology: v6e:2x2x1
jax: 0.10.0
libtpu: 0.0.40
codegen_flags: <defaults>
</compile_context>

<pallas_src>
import functools

import jax
import jax.numpy as jnp
from jax import lax
from jax.experimental import pallas as pl
from jax.experimental.pallas import tpu as pltpu

# ---- model dims (module defaults) -------------------------------------------
AGENT_TYPE_DIM = 6
EMBED_DIM = 64
H_DIM = 64
NUM_LAYERS = 1


# ---------------------------- Pallas kernel ----------------------------------
def vehicle_encoder_kernel(ids_ref, size_ref, w_in_ref, b_ref, w_hh_ref,
                           out_ref, xg_ref, *, seq_len, batch, agent_type_dim):
    ids = ids_ref[...]              # (T*B, 1) int32 agent types
    size = size_ref[...]            # (T*B, 2) f32 vehicle sizes
    w_in = w_in_ref[...]            # (A+2, 4H) [emb @ W_ih ; W_size @ W_ih]
    b = b_ref[...]                  # (1, 4H)   b_size@W_ih + b_ih + b_hh
    w_hh = w_hh_ref[...]            # (H, 4H)   recurrent weight

    tb = ids.shape[0]
    four_h = w_in.shape[1]
    h_dim = four_h // 4
    a = agent_type_dim

    # Build [one_hot(agent_type) | size] (T*B, A+2) and run ONE small MXU
    # matmul for ALL timesteps -> gate pre-activations, parked in VMEM scratch.
    col = lax.broadcasted_iota(jnp.int32, (tb, a + 2), 1)
    one_hot = (col == ids).astype(jnp.float32)                 # cols >= A are 0
    x_in = jnp.where(col == a, size[:, 0:1],
                     jnp.where(col == a + 1, size[:, 1:2], one_hot))
    xg_ref[...] = jnp.dot(x_in, w_in, preferred_element_type=jnp.float32) + b

    # LSTM recurrence (zero initial state), PyTorch gate order [i, f, g, o].
    def step(t, carry):
        h, c = carry
        start = pl.multiple_of(t * batch, batch)
        g_all = xg_ref[pl.ds(start, batch), :] + jnp.dot(
            h, w_hh, preferred_element_type=jnp.float32)
        i_g = jax.nn.sigmoid(g_all[:, 0 * h_dim:1 * h_dim])
        f_g = jax.nn.sigmoid(g_all[:, 1 * h_dim:2 * h_dim])
        g_g = jnp.tanh(g_all[:, 2 * h_dim:3 * h_dim])
        o_g = jax.nn.sigmoid(g_all[:, 3 * h_dim:4 * h_dim])
        c = f_g * c + i_g * g_g
        h = o_g * jnp.tanh(c)
        return h, c

    h0 = jnp.zeros((batch, h_dim), jnp.float32)
    c0 = jnp.zeros((batch, h_dim), jnp.float32)
    h, _ = lax.fori_loop(0, seq_len, step, (h0, c0), unroll=True)

    out_ref[...] = h


def vehicle_encoder_forward(agent_type, size, folded):
    """agent_type: (T, B, 1) int; size: (T, B, 2) f32 -> final_h (num_layers, B, H)."""
    seq_len, batch, _ = agent_type.shape
    ids = agent_type.reshape(seq_len * batch, 1).astype(jnp.int32)
    size_flat = size.reshape(seq_len * batch, 2).astype(jnp.float32)

    kernel = functools.partial(vehicle_encoder_kernel, seq_len=seq_len,
                               batch=batch, agent_type_dim=AGENT_TYPE_DIM)
    vmem = lambda: pl.BlockSpec(memory_space=pltpu.MemorySpace.VMEM)
    final_h = pl.pallas_call(
        kernel,
        out_shape=jax.ShapeDtypeStruct((batch, H_DIM), jnp.float32),
        in_specs=[vmem() for _ in range(5)],
        out_specs=vmem(),
        scratch_shapes=[pltpu.VMEM((seq_len * batch, 4 * H_DIM), jnp.float32)],
    )(ids, size_flat, folded["w_in_gate"], folded["b_gate"], folded["w_hh"])
    return final_h[None]          # (num_layers=1, batch, h_dim)


# ------------------------- deterministic parameters ---------------------------
def init_params(key):
    A, E, H = AGENT_TYPE_DIM, EMBED_DIM, H_DIM
    ks = jax.random.split(key, 7)

    emb = jax.random.normal(ks[0], (A, E), jnp.float32)              # nn.Embedding ~ N(0,1)
    bsz = 1.0 / (2.0 ** 0.5)
    w_size = jax.random.uniform(ks[1], (2, E), jnp.float32, -bsz, bsz)
    b_size = jax.random.uniform(ks[2], (E,), jnp.float32, -bsz, bsz)
    blstm = 1.0 / (H ** 0.5)
    w_ih = jax.random.uniform(ks[3], (2 * E, 4 * H), jnp.float32, -blstm, blstm)
    w_hh = jax.random.uniform(ks[4], (H, 4 * H), jnp.float32, -blstm, blstm)
    b_ih = jax.random.uniform(ks[5], (4 * H,), jnp.float32, -blstm, blstm)
    b_hh = jax.random.uniform(ks[6], (4 * H,), jnp.float32, -blstm, blstm)

    raw = dict(emb=emb, w_size=w_size, b_size=b_size,
               w_ih=w_ih, w_hh=w_hh, b_ih=b_ih, b_hh=b_hh)

    # Host-side constant folding: fold the embedding table, the size Linear,
    # and both LSTM biases through W_ih; stack into one (A+2, 4H) input matrix.
    gate_table = emb @ w_ih[:E, :]                                   # (A, 4H)
    w_sz_gate = w_size @ w_ih[E:, :]                                 # (2, 4H)
    w_in_gate = jnp.concatenate([gate_table, w_sz_gate], axis=0)     # (A+2, 4H)
    b_gate = (b_size @ w_ih[E:, :] + b_ih + b_hh).reshape(1, 4 * H)  # (1, 4H)
    folded = dict(w_in_gate=w_in_gate, b_gate=b_gate, w_hh=w_hh)
    return raw, folded


# ----------------------------- pure-JAX reference -----------------------------
def reference_forward(agent_type, size, raw):
    """Mirrors the PyTorch forward with the UN-folded parameters."""
    seq_len, batch, _ = agent_type.shape
    H = H_DIM
    at = agent_type[..., 0].astype(jnp.int32)                # (T, B)
    emb = raw["emb"][at]                                      # (T, B, E)
    size_emb = size @ raw["w_size"] + raw["b_size"]           # (T, B, E)
    x = jnp.concatenate([emb, size_emb], axis=-1)             # (T, B, 2E)

    h = jnp.zeros((batch, H), jnp.float32)
    c = jnp.zeros((batch, H), jnp.float32)
    for t in range(seq_len):
        gates = x[t] @ raw["w_ih"] + h @ raw["w_hh"] + raw["b_ih"] + raw["b_hh"]
        i_g = jax.nn.sigmoid(gates[:, 0 * H:1 * H])
        f_g = jax.nn.sigmoid(gates[:, 1 * H:2 * H])
        g_g = jnp.tanh(gates[:, 2 * H:3 * H])
        o_g = jax.nn.sigmoid(gates[:, 3 * H:4 * H])
        c = f_g * c + i_g * g_g
        h = o_g * jnp.tanh(c)
    return h[None]                                             # (1, B, H)


# --------------------------------- main ---------------------------------------
if __name__ == "__main__":
    key = jax.random.PRNGKey(0)
    kp, kt, ks = jax.random.split(key, 3)
    raw, folded = init_params(kp)

    T, B = 8, 8      # batch chosen as a multiple of 8 sublanes
    agent_type = jax.random.randint(kt, (T, B, 1), 0, AGENT_TYPE_DIM, jnp.int32)
    size = jax.random.normal(ks, (T, B, 2), jnp.float32)

    out = vehicle_encoder_forward(agent_type, size, folded)
    out = jax.block_until_ready(out)

    ref = reference_forward(agent_type, size, raw)
    assert out.shape == (NUM_LAYERS, B, H_DIM), out.shape
    assert bool(jnp.allclose(out, ref, atol=1e-4, rtol=1e-4)), "mismatch vs reference"
    print("KERNEL_OK")
</pallas_src>

<mosaic_0001>
module attributes {stable_mosaic.version = 11 : i64} {
  func.func @vehicle_encoder_kernel(%arg0: memref<64x1xi32, #tpu.memory_space<vmem>>, %arg1: memref<64x2xf32, #tpu.memory_space<vmem>>, %arg2: memref<8x256xf32, #tpu.memory_space<vmem>>, %arg3: memref<1x256xf32, #tpu.memory_space<vmem>>, %arg4: memref<64x256xf32, #tpu.memory_space<vmem>>, %arg5: memref<8x64xf32, #tpu.memory_space<vmem>>, %arg6: memref<64x256xf32, #tpu.memory_space<vmem>>) attributes {dimension_semantics = [], scalar_prefetch = 0 : i64, scratch_operands = 1 : i64, tpu.core_type = #tpu.core_type<tc>} {
    %c0 = arith.constant 0 : index
    %c0_0 = arith.constant 0 : index
    %0 = vector.load %arg0[%c0, %c0_0] : memref<64x1xi32, #tpu.memory_space<vmem>>, vector<64x1xi32>
    %c0_1 = arith.constant 0 : index
    %c0_2 = arith.constant 0 : index
    %1 = vector.load %arg1[%c0_1, %c0_2] : memref<64x2xf32, #tpu.memory_space<vmem>>, vector<64x2xf32>
    %c0_3 = arith.constant 0 : index
    %c0_4 = arith.constant 0 : index
    %2 = vector.load %arg2[%c0_3, %c0_4] : memref<8x256xf32, #tpu.memory_space<vmem>>, vector<8x256xf32>
    %c0_5 = arith.constant 0 : index
    %c0_6 = arith.constant 0 : index
    %3 = vector.load %arg3[%c0_5, %c0_6] : memref<1x256xf32, #tpu.memory_space<vmem>>, vector<1x256xf32>
    %c0_7 = arith.constant 0 : index
    %c0_8 = arith.constant 0 : index
    %4 = vector.load %arg4[%c0_7, %c0_8] : memref<64x256xf32, #tpu.memory_space<vmem>>, vector<64x256xf32>
    %5 = tpu.iota {dimensions = array<i32: 1>} : vector<64x8xi32>
    %6 = vector.broadcast %0 : vector<64x1xi32> to vector<64x8xi32>
    %7 = arith.cmpi eq, %5, %6 : vector<64x8xi32>
    %8 = arith.extui %7 : vector<64x8xi1> to vector<64x8xi32>
    %9 = arith.sitofp %8 : vector<64x8xi32> to vector<64x8xf32>
    %c6_i32 = arith.constant 6 : i32
    %10 = vector.broadcast %c6_i32 : i32 to vector<64x8xi32>
    %11 = arith.cmpi eq, %5, %10 : vector<64x8xi32>
    %12 = vector.extract_strided_slice %1 {offsets = [0, 0], sizes = [64, 1], strides = [1, 1]} : vector<64x2xf32> to vector<64x1xf32>
    %c7_i32 = arith.constant 7 : i32
    %13 = vector.broadcast %c7_i32 : i32 to vector<64x8xi32>
    %14 = arith.cmpi eq, %5, %13 : vector<64x8xi32>
    %15 = vector.extract_strided_slice %1 {offsets = [0, 1], sizes = [64, 1], strides = [1, 1]} : vector<64x2xf32> to vector<64x1xf32>
    %16 = vector.shape_cast %15 : vector<64x1xf32> to vector<64x1xf32>
    %17 = vector.broadcast %16 : vector<64x1xf32> to vector<64x8xf32>
    %18 = arith.select %14, %17, %9 : vector<64x8xi1>, vector<64x8xf32>
    %19 = vector.shape_cast %12 : vector<64x1xf32> to vector<64x1xf32>
    %20 = vector.broadcast %19 : vector<64x1xf32> to vector<64x8xf32>
    %21 = arith.select %11, %20, %18 : vector<64x8xi1>, vector<64x8xf32>
    %cst = arith.constant dense<0.000000e+00> : vector<64x256xf32>
    %22 = tpu.matmul %21, %2, %cst {dimension_numbers = #tpu.dot_dimension_numbers<[1], [0], [0], [1], [0, 0, 1, 1], [], []>} : vector<64x8xf32>, vector<8x256xf32>, vector<64x256xf32> -> vector<64x256xf32>
    %23 = vector.broadcast %3 : vector<1x256xf32> to vector<64x256xf32>
    %24 = arith.addf %22, %23 : vector<64x256xf32>
    %c0_9 = arith.constant 0 : index
    %c0_10 = arith.constant 0 : index
    %25 = vector.load %arg6[%c0_9, %c0_10] : memref<64x256xf32, #tpu.memory_space<vmem>>, vector<64x256xf32>
    tpu.vector_store %arg6[%c0_9, %c0_10], %24 {strides = array<i32>} : memref<64x256xf32, #tpu.memory_space<vmem>>, vector<64x256xf32>,
    %cst_11 = arith.constant 0.000000e+00 : f32
    %26 = vector.broadcast %cst_11 : f32 to vector<8x64xf32>
    %cst_12 = arith.constant 0.000000e+00 : f32
    %27 = vector.broadcast %cst_12 : f32 to vector<8x64xf32>
    %c0_i32 = arith.constant 0 : i32
    %c8_i32 = arith.constant 8 : i32
    %28 = arith.muli %c0_i32, %c8_i32 : i32
    %29 = tpu.assume_multiple %28, 8 : i32
    %30 = arith.index_cast %29 : i32 to index
    %c0_13 = arith.constant 0 : index
    %31 = vector.load %arg6[%30, %c0_13] : memref<64x256xf32, #tpu.memory_space<vmem>>, vector<8x256xf32>
    %cst_14 = arith.constant dense<0.000000e+00> : vector<8x256xf32>
    %32 = tpu.matmul %26, %4, %cst_14 {dimension_numbers = #tpu.dot_dimension_numbers<[1], [0], [0], [1], [0, 0, 1, 1], [], []>} : vector<8x64xf32>, vector<64x256xf32>, vector<8x256xf32> -> vector<8x256xf32>
    %33 = arith.addf %31, %32 : vector<8x256xf32>
    %34 = vector.extract_strided_slice %33 {offsets = [0, 0], sizes = [8, 64], strides = [1, 1]} : vector<8x256xf32> to vector<8x64xf32>
    %35 = arith.negf %34 : vector<8x64xf32>
    %36 = math.exp %35 : vector<8x64xf32>
    %cst_15 = arith.constant 1.000000e+00 : f32
    %37 = vector.broadcast %cst_15 : f32 to vector<8x64xf32>
    %38 = arith.addf %37, %36 : vector<8x64xf32>
    %39 = arith.divf %37, %38 : vector<8x64xf32>
    %40 = vector.extract_strided_slice %33 {offsets = [0, 64], sizes = [8, 64], strides = [1, 1]} : vector<8x256xf32> to vector<8x64xf32>
    %41 = arith.negf %40 : vector<8x64xf32>
    %42 = math.exp %41 : vector<8x64xf32>
    %cst_16 = arith.constant 1.000000e+00 : f32
    %43 = vector.broadcast %cst_16 : f32 to vector<8x64xf32>
    %44 = arith.addf %43, %42 : vector<8x64xf32>
    %45 = arith.divf %43, %44 : vector<8x64xf32>
    %46 = vector.extract_strided_slice %33 {offsets = [0, 128], sizes = [8, 64], strides = [1, 1]} : vector<8x256xf32> to vector<8x64xf32>
    %47 = math.tanh %46 : vector<8x64xf32>
    %48 = vector.extract_strided_slice %33 {offsets = [0, 192], sizes = [8, 64], strides = [1, 1]} : vector<8x256xf32> to vector<8x64xf32>
    %49 = arith.negf %48 : vector<8x64xf32>
    %50 = math.exp %49 : vector<8x64xf32>
    %cst_17 = arith.constant 1.000000e+00 : f32
    %51 = vector.broadcast %cst_17 : f32 to vector<8x64xf32>
    %52 = arith.addf %51, %50 : vector<8x64xf32>
    %53 = arith.divf %51, %52 : vector<8x64xf32>
    %54 = arith.mulf %45, %27 : vector<8x64xf32>
    %55 = arith.mulf %39, %47 : vector<8x64xf32>
    %56 = arith.addf %54, %55 : vector<8x64xf32>
    %57 = math.tanh %56 : vector<8x64xf32>
    %58 = arith.mulf %53, %57 : vector<8x64xf32>
    %c1_i32 = arith.constant 1 : i32
    %c8_i32_18 = arith.constant 8 : i32
    %59 = arith.muli %c1_i32, %c8_i32_18 : i32
    %60 = tpu.assume_multiple %59, 8 : i32
    %61 = arith.index_cast %60 : i32 to index
    %c0_19 = arith.constant 0 : index
    %62 = vector.load %arg6[%61, %c0_19] : memref<64x256xf32, #tpu.memory_space<vmem>>, vector<8x256xf32>
    %cst_20 = arith.constant dense<0.000000e+00> : vector<8x256xf32>
    %63 = tpu.matmul %58, %4, %cst_20 {dimension_numbers = #tpu.dot_dimension_numbers<[1], [0], [0], [1], [0, 0, 1, 1], [], []>} : vector<8x64xf32>, vector<64x256xf32>, vector<8x256xf32> -> vector<8x256xf32>
    %64 = arith.addf %62, %63 : vector<8x256xf32>
    %65 = vector.extract_strided_slice %64 {offsets = [0, 0], sizes = [8, 64], strides = [1, 1]} : vector<8x256xf32> to vector<8x64xf32>
    %66 = arith.negf %65 : vector<8x64xf32>
    %67 = math.exp %66 : vector<8x64xf32>
    %cst_21 = arith.constant 1.000000e+00 : f32
    %68 = vector.broadcast %cst_21 : f32 to vector<8x64xf32>
    %69 = arith.addf %68, %67 : vector<8x64xf32>
    %70 = arith.divf %68, %69 : vector<8x64xf32>
    %71 = vector.extract_strided_slice %64 {offsets = [0, 64], sizes = [8, 64], strides = [1, 1]} : vector<8x256xf32> to vector<8x64xf32>
    %72 = arith.negf %71 : vector<8x64xf32>
    %73 = math.exp %72 : vector<8x64xf32>
    %cst_22 = arith.constant 1.000000e+00 : f32
    %74 = vector.broadcast %cst_22 : f32 to vector<8x64xf32>
    %75 = arith.addf %74, %73 : vector<8x64xf32>
    %76 = arith.divf %74, %75 : vector<8x64xf32>
    %77 = vector.extract_strided_slice %64 {offsets = [0, 128], sizes = [8, 64], strides = [1, 1]} : vector<8x256xf32> to vector<8x64xf32>
    %78 = math.tanh %77 : vector<8x64xf32>
    %79 = vector.extract_strided_slice %64 {offsets = [0, 192], sizes = [8, 64], strides = [1, 1]} : vector<8x256xf32> to vector<8x64xf32>
    %80 = arith.negf %79 : vector<8x64xf32>
    %81 = math.exp %80 : vector<8x64xf32>
    %cst_23 = arith.constant 1.000000e+00 : f32
    %82 = vector.broadcast %cst_23 : f32 to vector<8x64xf32>
    %83 = arith.addf %82, %81 : vector<8x64xf32>
    %84 = arith.divf %82, %83 : vector<8x64xf32>
    %85 = arith.mulf %76, %56 : vector<8x64xf32>
    %86 = arith.mulf %70, %78 : vector<8x64xf32>
    %87 = arith.addf %85, %86 : vector<8x64xf32>
    %88 = math.tanh %87 : vector<8x64xf32>
    %89 = arith.mulf %84, %88 : vector<8x64xf32>
    %c2_i32 = arith.constant 2 : i32
    %c8_i32_24 = arith.constant 8 : i32
    %90 = arith.muli %c2_i32, %c8_i32_24 : i32
    %91 = tpu.assume_multiple %90, 8 : i32
    %92 = arith.index_cast %91 : i32 to index
    %c0_25 = arith.constant 0 : index
    %93 = vector.load %arg6[%92, %c0_25] : memref<64x256xf32, #tpu.memory_space<vmem>>, vector<8x256xf32>
    %cst_26 = arith.constant dense<0.000000e+00> : vector<8x256xf32>
    %94 = tpu.matmul %89, %4, %cst_26 {dimension_numbers = #tpu.dot_dimension_numbers<[1], [0], [0], [1], [0, 0, 1, 1], [], []>} : vector<8x64xf32>, vector<64x256xf32>, vector<8x256xf32> -> vector<8x256xf32>
    %95 = arith.addf %93, %94 : vector<8x256xf32>
    %96 = vector.extract_strided_slice %95 {offsets = [0, 0], sizes = [8, 64], strides = [1, 1]} : vector<8x256xf32> to vector<8x64xf32>
    %97 = arith.negf %96 : vector<8x64xf32>
    %98 = math.exp %97 : vector<8x64xf32>
    %cst_27 = arith.constant 1.000000e+00 : f32
    %99 = vector.broadcast %cst_27 : f32 to vector<8x64xf32>
    %100 = arith.addf %99, %98 : vector<8x64xf32>
    %101 = arith.divf %99, %100 : vector<8x64xf32>
    %102 = vector.extract_strided_slice %95 {offsets = [0, 64], sizes = [8, 64], strides = [1, 1]} : vector<8x256xf32> to vector<8x64xf32>
    %103 = arith.negf %102 : vector<8x64xf32>
    %104 = math.exp %103 : vector<8x64xf32>
    %cst_28 = arith.constant 1.000000e+00 : f32
    %105 = vector.broadcast %cst_28 : f32 to vector<8x64xf32>
    %106 = arith.addf %105, %104 : vector<8x64xf32>
    %107 = arith.divf %105, %106 : vector<8x64xf32>
    %108 = vector.extract_strided_slice %95 {offsets = [0, 128], sizes = [8, 64], strides = [1, 1]} : vector<8x256xf32> to vector<8x64xf32>
    %109 = math.tanh %108 : vector<8x64xf32>
    %110 = vector.extract_strided_slice %95 {offsets = [0, 192], sizes = [8, 64], strides = [1, 1]} : vector<8x256xf32> to vector<8x64xf32>
    %111 = arith.negf %110 : vector<8x64xf32>
    %112 = math.exp %111 : vector<8x64xf32>
    %cst_29 = arith.constant 1.000000e+00 : f32
    %113 = vector.broadcast %cst_29 : f32 to vector<8x64xf32>
    %114 = arith.addf %113, %112 : vector<8x64xf32>
    %115 = arith.divf %113, %114 : vector<8x64xf32>
    %116 = arith.mulf %107, %87 : vector<8x64xf32>
    %117 = arith.mulf %101, %109 : vector<8x64xf32>
    %118 = arith.addf %116, %117 : vector<8x64xf32>
    %119 = math.tanh %118 : vector<8x64xf32>
    %120 = arith.mulf %115, %119 : vector<8x64xf32>
    %c3_i32 = arith.constant 3 : i32
    %c8_i32_30 = arith.constant 8 : i32
    %121 = arith.muli %c3_i32, %c8_i32_30 : i32
    %122 = tpu.assume_multiple %121, 8 : i32
    %123 = arith.index_cast %122 : i32 to index
    %c0_31 = arith.constant 0 : index
    %124 = vector.load %arg6[%123, %c0_31] : memref<64x256xf32, #tpu.memory_space<vmem>>, vector<8x256xf32>
    %cst_32 = arith.constant dense<0.000000e+00> : vector<8x256xf32>
    %125 = tpu.matmul %120, %4, %cst_32 {dimension_numbers = #tpu.dot_dimension_numbers<[1], [0], [0], [1], [0, 0, 1, 1], [], []>} : vector<8x64xf32>, vector<64x256xf32>, vector<8x256xf32> -> vector<8x256xf32>
    %126 = arith.addf %124, %125 : vector<8x256xf32>
    %127 = vector.extract_strided_slice %126 {offsets = [0, 0], sizes = [8, 64], strides = [1, 1]} : vector<8x256xf32> to vector<8x64xf32>
    %128 = arith.negf %127 : vector<8x64xf32>
    %129 = math.exp %128 : vector<8x64xf32>
    %cst_33 = arith.constant 1.000000e+00 : f32
    %130 = vector.broadcast %cst_33 : f32 to vector<8x64xf32>
    %131 = arith.addf %130, %129 : vector<8x64xf32>
    %132 = arith.divf %130, %131 : vector<8x64xf32>
    %133 = vector.extract_strided_slice %126 {offsets = [0, 64], sizes = [8, 64], strides = [1, 1]} : vector<8x256xf32> to vector<8x64xf32>
    %134 = arith.negf %133 : vector<8x64xf32>
    %135 = math.exp %134 : vector<8x64xf32>
    %cst_34 = arith.constant 1.000000e+00 : f32
    %136 = vector.broadcast %cst_34 : f32 to vector<8x64xf32>
    %137 = arith.addf %136, %135 : vector<8x64xf32>
    %138 = arith.divf %136, %137 : vector<8x64xf32>
    %139 = vector.extract_strided_slice %126 {offsets = [0, 128], sizes = [8, 64], strides = [1, 1]} : vector<8x256xf32> to vector<8x64xf32>
    %140 = math.tanh %139 : vector<8x64xf32>
    %141 = vector.extract_strided_slice %126 {offsets = [0, 192], sizes = [8, 64], strides = [1, 1]} : vector<8x256xf32> to vector<8x64xf32>
    %142 = arith.negf %141 : vector<8x64xf32>
    %143 = math.exp %142 : vector<8x64xf32>
    %cst_35 = arith.constant 1.000000e+00 : f32
    %144 = vector.broadcast %cst_35 : f32 to vector<8x64xf32>
    %145 = arith.addf %144, %143 : vector<8x64xf32>
    %146 = arith.divf %144, %145 : vector<8x64xf32>
    %147 = arith.mulf %138, %118 : vector<8x64xf32>
    %148 = arith.mulf %132, %140 : vector<8x64xf32>
    %149 = arith.addf %147, %148 : vector<8x64xf32>
    %150 = math.tanh %149 : vector<8x64xf32>
    %151 = arith.mulf %146, %150 : vector<8x64xf32>
    %c4_i32 = arith.constant 4 : i32
    %c8_i32_36 = arith.constant 8 : i32
    %152 = arith.muli %c4_i32, %c8_i32_36 : i32
    %153 = tpu.assume_multiple %152, 8 : i32
    %154 = arith.index_cast %153 : i32 to index
    %c0_37 = arith.constant 0 : index
    %155 = vector.load %arg6[%154, %c0_37] : memref<64x256xf32, #tpu.memory_space<vmem>>, vector<8x256xf32>
    %cst_38 = arith.constant dense<0.000000e+00> : vector<8x256xf32>
    %156 = tpu.matmul %151, %4, %cst_38 {dimension_numbers = #tpu.dot_dimension_numbers<[1], [0], [0], [1], [0, 0, 1, 1], [], []>} : vector<8x64xf32>, vector<64x256xf32>, vector<8x256xf32> -> vector<8x256xf32>
    %157 = arith.addf %155, %156 : vector<8x256xf32>
    %158 = vector.extract_strided_slice %157 {offsets = [0, 0], sizes = [8, 64], strides = [1, 1]} : vector<8x256xf32> to vector<8x64xf32>
    %159 = arith.negf %158 : vector<8x64xf32>
    %160 = math.exp %159 : vector<8x64xf32>
    %cst_39 = arith.constant 1.000000e+00 : f32
    %161 = vector.broadcast %cst_39 : f32 to vector<8x64xf32>
    %162 = arith.addf %161, %160 : vector<8x64xf32>
    %163 = arith.divf %161, %162 : vector<8x64xf32>
    %164 = vector.extract_strided_slice %157 {offsets = [0, 64], sizes = [8, 64], strides = [1, 1]} : vector<8x256xf32> to vector<8x64xf32>
    %165 = arith.negf %164 : vector<8x64xf32>
    %166 = math.exp %165 : vector<8x64xf32>
    %cst_40 = arith.constant 1.000000e+00 : f32
    %167 = vector.broadcast %cst_40 : f32 to vector<8x64xf32>
    %168 = arith.addf %167, %166 : vector<8x64xf32>
    %169 = arith.divf %167, %168 : vector<8x64xf32>
    %170 = vector.extract_strided_slice %157 {offsets = [0, 128], sizes = [8, 64], strides = [1, 1]} : vector<8x256xf32> to vector<8x64xf32>
    %171 = math.tanh %170 : vector<8x64xf32>
    %172 = vector.extract_strided_slice %157 {offsets = [0, 192], sizes = [8, 64], strides = [1, 1]} : vector<8x256xf32> to vector<8x64xf32>
    %173 = arith.negf %172 : vector<8x64xf32>
    %174 = math.exp %173 : vector<8x64xf32>
    %cst_41 = arith.constant 1.000000e+00 : f32
    %175 = vector.broadcast %cst_41 : f32 to vector<8x64xf32>
    %176 = arith.addf %175, %174 : vector<8x64xf32>
    %177 = arith.divf %175, %176 : vector<8x64xf32>
    %178 = arith.mulf %169, %149 : vector<8x64xf32>
    %179 = arith.mulf %163, %171 : vector<8x64xf32>
    %180 = arith.addf %178, %179 : vector<8x64xf32>
    %181 = math.tanh %180 : vector<8x64xf32>
    %182 = arith.mulf %177, %181 : vector<8x64xf32>
    %c5_i32 = arith.constant 5 : i32
    %c8_i32_42 = arith.constant 8 : i32
    %183 = arith.muli %c5_i32, %c8_i32_42 : i32
    %184 = tpu.assume_multiple %183, 8 : i32
    %185 = arith.index_cast %184 : i32 to index
    %c0_43 = arith.constant 0 : index
    %186 = vector.load %arg6[%185, %c0_43] : memref<64x256xf32, #tpu.memory_space<vmem>>, vector<8x256xf32>
    %cst_44 = arith.constant dense<0.000000e+00> : vector<8x256xf32>
    %187 = tpu.matmul %182, %4, %cst_44 {dimension_numbers = #tpu.dot_dimension_numbers<[1], [0], [0], [1], [0, 0, 1, 1], [], []>} : vector<8x64xf32>, vector<64x256xf32>, vector<8x256xf32> -> vector<8x256xf32>
    %188 = arith.addf %186, %187 : vector<8x256xf32>
    %189 = vector.extract_strided_slice %188 {offsets = [0, 0], sizes = [8, 64], strides = [1, 1]} : vector<8x256xf32> to vector<8x64xf32>
    %190 = arith.negf %189 : vector<8x64xf32>
    %191 = math.exp %190 : vector<8x64xf32>
    %cst_45 = arith.constant 1.000000e+00 : f32
    %192 = vector.broadcast %cst_45 : f32 to vector<8x64xf32>
    %193 = arith.addf %192, %191 : vector<8x64xf32>
    %194 = arith.divf %192, %193 : vector<8x64xf32>
    %195 = vector.extract_strided_slice %188 {offsets = [0, 64], sizes = [8, 64], strides = [1, 1]} : vector<8x256xf32> to vector<8x64xf32>
    %196 = arith.negf %195 : vector<8x64xf32>
    %197 = math.exp %196 : vector<8x64xf32>
    %cst_46 = arith.constant 1.000000e+00 : f32
    %198 = vector.broadcast %cst_46 : f32 to vector<8x64xf32>
    %199 = arith.addf %198, %197 : vector<8x64xf32>
    %200 = arith.divf %198, %199 : vector<8x64xf32>
    %201 = vector.extract_strided_slice %188 {offsets = [0, 128], sizes = [8, 64], strides = [1, 1]} : vector<8x256xf32> to vector<8x64xf32>
    %202 = math.tanh %201 : vector<8x64xf32>
    %203 = vector.extract_strided_slice %188 {offsets = [0, 192], sizes = [8, 64], strides = [1, 1]} : vector<8x256xf32> to vector<8x64xf32>
    %204 = arith.negf %203 : vector<8x64xf32>
    %205 = math.exp %204 : vector<8x64xf32>
    %cst_47 = arith.constant 1.000000e+00 : f32
    %206 = vector.broadcast %cst_47 : f32 to vector<8x64xf32>
    %207 = arith.addf %206, %205 : vector<8x64xf32>
    %208 = arith.divf %206, %207 : vector<8x64xf32>
    %209 = arith.mulf %200, %180 : vector<8x64xf32>
    %210 = arith.mulf %194, %202 : vector<8x64xf32>
    %211 = arith.addf %209, %210 : vector<8x64xf32>
    %212 = math.tanh %211 : vector<8x64xf32>
    %213 = arith.mulf %208, %212 : vector<8x64xf32>
    %c6_i32_48 = arith.constant 6 : i32
    %c8_i32_49 = arith.constant 8 : i32
    %214 = arith.muli %c6_i32_48, %c8_i32_49 : i32
    %215 = tpu.assume_multiple %214, 8 : i32
    %216 = arith.index_cast %215 : i32 to index
    %c0_50 = arith.constant 0 : index
    %217 = vector.load %arg6[%216, %c0_50] : memref<64x256xf32, #tpu.memory_space<vmem>>, vector<8x256xf32>
    %cst_51 = arith.constant dense<0.000000e+00> : vector<8x256xf32>
    %218 = tpu.matmul %213, %4, %cst_51 {dimension_numbers = #tpu.dot_dimension_numbers<[1], [0], [0], [1], [0, 0, 1, 1], [], []>} : vector<8x64xf32>, vector<64x256xf32>, vector<8x256xf32> -> vector<8x256xf32>
    %219 = arith.addf %217, %218 : vector<8x256xf32>
    %220 = vector.extract_strided_slice %219 {offsets = [0, 0], sizes = [8, 64], strides = [1, 1]} : vector<8x256xf32> to vector<8x64xf32>
    %221 = arith.negf %220 : vector<8x64xf32>
    %222 = math.exp %221 : vector<8x64xf32>
    %cst_52 = arith.constant 1.000000e+00 : f32
    %223 = vector.broadcast %cst_52 : f32 to vector<8x64xf32>
    %224 = arith.addf %223, %222 : vector<8x64xf32>
    %225 = arith.divf %223, %224 : vector<8x64xf32>
    %226 = vector.extract_strided_slice %219 {offsets = [0, 64], sizes = [8, 64], strides = [1, 1]} : vector<8x256xf32> to vector<8x64xf32>
    %227 = arith.negf %226 : vector<8x64xf32>
    %228 = math.exp %227 : vector<8x64xf32>
    %cst_53 = arith.constant 1.000000e+00 : f32
    %229 = vector.broadcast %cst_53 : f32 to vector<8x64xf32>
    %230 = arith.addf %229, %228 : vector<8x64xf32>
    %231 = arith.divf %229, %230 : vector<8x64xf32>
    %232 = vector.extract_strided_slice %219 {offsets = [0, 128], sizes = [8, 64], strides = [1, 1]} : vector<8x256xf32> to vector<8x64xf32>
    %233 = math.tanh %232 : vector<8x64xf32>
    %234 = vector.extract_strided_slice %219 {offsets = [0, 192], sizes = [8, 64], strides = [1, 1]} : vector<8x256xf32> to vector<8x64xf32>
    %235 = arith.negf %234 : vector<8x64xf32>
    %236 = math.exp %235 : vector<8x64xf32>
    %cst_54 = arith.constant 1.000000e+00 : f32
    %237 = vector.broadcast %cst_54 : f32 to vector<8x64xf32>
    %238 = arith.addf %237, %236 : vector<8x64xf32>
    %239 = arith.divf %237, %238 : vector<8x64xf32>
    %240 = arith.mulf %231, %211 : vector<8x64xf32>
    %241 = arith.mulf %225, %233 : vector<8x64xf32>
    %242 = arith.addf %240, %241 : vector<8x64xf32>
    %243 = math.tanh %242 : vector<8x64xf32>
    %244 = arith.mulf %239, %243 : vector<8x64xf32>
    %c7_i32_55 = arith.constant 7 : i32
    %c8_i32_56 = arith.constant 8 : i32
    %245 = arith.muli %c7_i32_55, %c8_i32_56 : i32
    %246 = tpu.assume_multiple %245, 8 : i32
    %247 = arith.index_cast %246 : i32 to index
    %c0_57 = arith.constant 0 : index
    %248 = vector.load %arg6[%247, %c0_57] : memref<64x256xf32, #tpu.memory_space<vmem>>, vector<8x256xf32>
    %cst_58 = arith.constant dense<0.000000e+00> : vector<8x256xf32>
    %249 = tpu.matmul %244, %4, %cst_58 {dimension_numbers = #tpu.dot_dimension_numbers<[1], [0], [0], [1], [0, 0, 1, 1], [], []>} : vector<8x64xf32>, vector<64x256xf32>, vector<8x256xf32> -> vector<8x256xf32>
    %250 = arith.addf %248, %249 : vector<8x256xf32>
    %251 = vector.extract_strided_slice %250 {offsets = [0, 0], sizes = [8, 64], strides = [1, 1]} : vector<8x256xf32> to vector<8x64xf32>
    %252 = arith.negf %251 : vector<8x64xf32>
    %253 = math.exp %252 : vector<8x64xf32>
    %cst_59 = arith.constant 1.000000e+00 : f32
    %254 = vector.broadcast %cst_59 : f32 to vector<8x64xf32>
    %255 = arith.addf %254, %253 : vector<8x64xf32>
    %256 = arith.divf %254, %255 : vector<8x64xf32>
    %257 = vector.extract_strided_slice %250 {offsets = [0, 64], sizes = [8, 64], strides = [1, 1]} : vector<8x256xf32> to vector<8x64xf32>
    %258 = arith.negf %257 : vector<8x64xf32>
    %259 = math.exp %258 : vector<8x64xf32>
    %cst_60 = arith.constant 1.000000e+00 : f32
    %260 = vector.broadcast %cst_60 : f32 to vector<8x64xf32>
    %261 = arith.addf %260, %259 : vector<8x64xf32>
    %262 = arith.divf %260, %261 : vector<8x64xf32>
    %263 = vector.extract_strided_slice %250 {offsets = [0, 128], sizes = [8, 64], strides = [1, 1]} : vector<8x256xf32> to vector<8x64xf32>
    %264 = math.tanh %263 : vector<8x64xf32>
    %265 = vector.extract_strided_slice %250 {offsets = [0, 192], sizes = [8, 64], strides = [1, 1]} : vector<8x256xf32> to vector<8x64xf32>
    %266 = arith.negf %265 : vector<8x64xf32>
    %267 = math.exp %266 : vector<8x64xf32>
    %cst_61 = arith.constant 1.000000e+00 : f32
    %268 = vector.broadcast %cst_61 : f32 to vector<8x64xf32>
    %269 = arith.addf %268, %267 : vector<8x64xf32>
    %270 = arith.divf %268, %269 : vector<8x64xf32>
    %271 = arith.mulf %262, %242 : vector<8x64xf32>
    %272 = arith.mulf %256, %264 : vector<8x64xf32>
    %273 = arith.addf %271, %272 : vector<8x64xf32>
    %274 = math.tanh %273 : vector<8x64xf32>
    %275 = arith.mulf %270, %274 : vector<8x64xf32>
    %c8_i32_62 = arith.constant 8 : i32
    %c0_63 = arith.constant 0 : index
    %c0_64 = arith.constant 0 : index
    %276 = vector.load %arg5[%c0_63, %c0_64] : memref<8x64xf32, #tpu.memory_space<vmem>>, vector<8x64xf32>
    tpu.vector_store %arg5[%c0_63, %c0_64], %275 {strides = array<i32>} : memref<8x64xf32, #tpu.memory_space<vmem>>, vector<8x64xf32>,
    return
  }
}

</mosaic_0001>

<llo_original>
// kernel: tpu_custom_call.1
$region0: #{tpu_custom_call.1}
  #allocation0 [shape = 'u32[]', space=smem, size = 0x4, offset = 0x4, fixed_abs, tag = 'smem constant byte address 0x4 - core index']
  #allocation1 [shape = 'u32[144,128]{1,0:T(1,128)}', space=vmem, size = 0x12000, scoped, tag = 'internal scratch']
  #allocation2 [shape = 'f32[64,256]{1,0:T(8,128)}', space=vmem, size = 0x10000, scoped, tag = 'scratch operand']
  %s0 = inlined_call_operand.vmem [shape: s32[64,1], index: 0, kind: input, shape index: {}]
  %s1 = inlined_call_operand.vmem [shape: f32[64,2], index: 1, kind: input, shape index: {}]
  %s2 = inlined_call_operand.hbm [shape: f32[8,256], index: 2, kind: input, shape index: {}]
  %s3 = inlined_call_operand.vmem [shape: f32[1,256], index: 3, kind: input, shape index: {}]
  %s4 = inlined_call_operand.vmem [shape: f32[64,256], index: 4, kind: input, shape index: {}]
  %s5 = inlined_call_operand.hbm [shape: f32[8,64], index: 5, kind: output, shape index: {}]
  %s6 = sld [smem:[#allocation0]]
  $region34: #{tpu_custom_call.1} parent=0
    _
  %s8 = ssub.s32 1, %s6
  %s9 = scalar_select 0, %s8, %s6
  $region1: #{tpu_custom_call.1} parent=0
    #allocation3 [shape = 'u8[8192]{0}', space=vmem, size = 0x2000, scoped, tag = 'input window, operand 2, single buffered']
    #allocation4 [shape = 's32[1]{0}', space=sflag, size = 0x4, scoped, tag = 'scoped memory for tpu_custom_call.1']
    #allocation5 [shape = 's32[1]{0}', space=sflag, size = 0x4, scoped, tag = 'scoped memory for tpu_custom_call.1']
    #allocation6 [shape = 'u8[4096]{0}', space=vmem, size = 0x1000, scoped, tag = 'output window, operand 0, single buffered']
    %10 = vsyncpa [#allocation4], 0
    %11 = vsyncpa [#allocation5], 0
    // Predicated region
    $region2: #{tpu_custom_call.1} parent=1 // pred_check
      _
    $region3: #{tpu_custom_call.1} parent=1 // pred_check_branch
      %13 = sbr.rel (0) target = $region5
    $region4: #{tpu_custom_call.1} parent=1 // pred_region
      _
    $region5: #{tpu_custom_call.1} parent=1 // pred_fallthru
      _
    // Predicated region
    $region6: #{tpu_custom_call.1} parent=1 // pred_check
      _
    $region7: #{tpu_custom_call.1} parent=1 // pred_check_branch
      %15 = sbr.rel (0) target = $region9
    $region8: #{tpu_custom_call.1} parent=1 // pred_region
      _
    $region9: #{tpu_custom_call.1} parent=1 // pred_fallthru
      _
    // Predicated region
    $region10: #{tpu_custom_call.1} parent=1 // pred_check
      _
    $region11: #{tpu_custom_call.1} parent=1 // pred_check_branch
      %17 = sbr.rel (0) target = $region13
    $region12: #{tpu_custom_call.1} parent=1 // pred_region
      %s19 = ssub.s32 256, 256
      %20 = vsyncadd [#allocation4], %s19
      %s22 = sshll.u32 [#allocation3], 4
      %s23 = int_to_ptr.vmem [resolvable:$true] %s22
      %25 = dma.hbm_to_vmem [thread:$0]  %s2, 256, %s23, [#allocation4]
    $region13: #{tpu_custom_call.1} parent=1 // pred_fallthru
      _
    // Predicated region
    $region14: #{tpu_custom_call.1} parent=1 // pred_check
      _
    $region15: #{tpu_custom_call.1} parent=1 // pred_check_branch
      %27 = sbr.rel (0) target = $region17
    $region16: #{tpu_custom_call.1} parent=1 // pred_region
      _
    $region17: #{tpu_custom_call.1} parent=1 // pred_fallthru
      _
    // Predicated region
    $region18: #{tpu_custom_call.1} parent=1 // pred_check
      _
    $region19: #{tpu_custom_call.1} parent=1 // pred_check_branch
      %29 = sbr.rel (0) target = $region21
    $region20: #{tpu_custom_call.1} parent=1 // pred_region
      _
    $region21: #{tpu_custom_call.1} parent=1 // pred_fallthru
      _
    // Predicated region
    $region22: #{tpu_custom_call.1} parent=1 // pred_check
      _
    $region23: #{tpu_custom_call.1} parent=1 // pred_check_branch
      %31 = sbr.rel (0) target = $region25
    $region24: #{tpu_custom_call.1} parent=1 // pred_region
      %32 = dma.done [#allocation4], 256
    $region25: #{tpu_custom_call.1} parent=1 // pred_fallthru
      _
    %v33 = vld [vmem:[%s0] sm:$0xff]
    %v34 = vld [vmem:[%s0 + $0x8] sm:$0xff]
    %v35 = vld [vmem:[%s0 + $0x10] sm:$0xff]
    %v36 = vld [vmem:[%s0 + $0x18] sm:$0xff]
    %v37 = vld [vmem:[%s0 + $0x20] sm:$0xff]
    %v38 = vld [vmem:[%s0 + $0x28] sm:$0xff]
    %v39 = vld [vmem:[%s0 + $0x30] sm:$0xff]
    %v40 = vld [vmem:[%s0 + $0x38] sm:$0xff]
    %v41 = vld [vmem:[%s1] sm:$0xff]
    %v42 = vld [vmem:[%s1 + $0x8] sm:$0xff]
    %v43 = vld [vmem:[%s1 + $0x10] sm:$0xff]
    %v44 = vld [vmem:[%s1 + $0x18] sm:$0xff]
    %v45 = vld [vmem:[%s1 + $0x20] sm:$0xff]
    %v46 = vld [vmem:[%s1 + $0x28] sm:$0xff]
    %v47 = vld [vmem:[%s1 + $0x30] sm:$0xff]
    %v48 = vld [vmem:[%s1 + $0x38] sm:$0xff]
    %v49 = vld [vmem:[#allocation3] sm:$0xff]
    %v50 = vld [vmem:[#allocation3 + $0x8] sm:$0xff]
    %v51 = vld [vmem:[%s3] sm:$0x3]
    %v52 = vld [vmem:[%s4] sm:$0xff]
    %v53 = vld [vmem:[%s4 + $0x8] sm:$0xff]
    %v54 = vld [vmem:[%s4 + $0x10] sm:$0xff]
    %v55 = vld [vmem:[%s4 + $0x18] sm:$0xff]
    %v56 = vld [vmem:[%s4 + $0x20] sm:$0xff]
    %v57 = vld [vmem:[%s4 + $0x28] sm:$0xff]
    %v58 = vld [vmem:[%s4 + $0x30] sm:$0xff]
    %v59 = vld [vmem:[%s4 + $0x38] sm:$0xff]
    %v60 = vld [vmem:[%s4 + $0x40] sm:$0xff]
    %v61 = vld [vmem:[%s4 + $0x48] sm:$0xff]
    %v62 = vld [vmem:[%s4 + $0x50] sm:$0xff]
    %v63 = vld [vmem:[%s4 + $0x58] sm:$0xff]
    %v64 = vld [vmem:[%s4 + $0x60] sm:$0xff]
    %v65 = vld [vmem:[%s4 + $0x68] sm:$0xff]
    %v66 = vld [vmem:[%s4 + $0x70] sm:$0xff]
    %v67 = vld [vmem:[%s4 + $0x78] sm:$0xff]
    %v68 = vlaneseq
    %v69 = vand.u32 %v68, 127
    %70 = vset.pattern.permute.xlu0 0
    %71 = vperm.xlu0 %70, %v33
    %v72 = vpop.permute.xlu0 %71
    %73 = vset.pattern.permute.xlu0 0
    %74 = vperm.xlu0 %73, %v34
    %v75 = vpop.permute.xlu0 %74
    %76 = vset.pattern.permute.xlu0 0
    %77 = vperm.xlu0 %76, %v35
    %v78 = vpop.permute.xlu0 %77
    %79 = vset.pattern.permute.xlu0 0
    %80 = vperm.xlu0 %79, %v36
    %v81 = vpop.permute.xlu0 %80
    %82 = vset.pattern.permute.xlu0 0
    %83 = vperm.xlu0 %82, %v37
    %v84 = vpop.permute.xlu0 %83
    %85 = vset.pattern.permute.xlu0 0
    %86 = vperm.xlu0 %85, %v38
    %v87 = vpop.permute.xlu0 %86
    %88 = vset.pattern.permute.xlu0 0
    %89 = vperm.xlu0 %88, %v39
    %v90 = vpop.permute.xlu0 %89
    %91 = vset.pattern.permute.xlu0 0
    %92 = vperm.xlu0 %91, %v40
    %v93 = vpop.permute.xlu0 %92
    %vm94 = vcmp.eq.s32.totalorder %v69, %v72
    %vm95 = vcmp.eq.s32.totalorder %v69, %v75
    %vm96 = vcmp.eq.s32.totalorder %v69, %v78
    %vm97 = vcmp.eq.s32.totalorder %v69, %v81
    %vm98 = vcmp.eq.s32.totalorder %v69, %v84
    %vm99 = vcmp.eq.s32.totalorder %v69, %v87
    %vm100 = vcmp.eq.s32.totalorder %v69, %v90
    %vm101 = vcmp.eq.s32.totalorder %v69, %v93
    %v102 = vsel %vm94, 1, 0
    %v103 = vsel %vm95, 1, 0
    %v104 = vsel %vm96, 1, 0
    %v105 = vsel %vm97, 1, 0
    %v106 = vsel %vm98, 1, 0
    %v107 = vsel %vm99, 1, 0
    %v108 = vsel %vm100, 1, 0
    %v109 = vsel %vm101, 1, 0
    %v110 = vcvt.s32.f32 %v102
    %v111 = vcvt.s32.f32 %v103
    %v112 = vcvt.s32.f32 %v104
    %v113 = vcvt.s32.f32 %v105
    %v114 = vcvt.s32.f32 %v106
    %v115 = vcvt.s32.f32 %v107
    %v116 = vcvt.s32.f32 %v108
    %v117 = vcvt.s32.f32 %v109
    %vm118 = vcmp.eq.s32.totalorder %v69, 6
    %vm119 = vcmp.eq.s32.totalorder %v69, 7
    %121 = vset.pattern.permute.xlu0 1
    %122 = vperm.xlu0 %121, %v41
    %v123 = vpop.permute.xlu0 %122
    %126 = vset.pattern.permute.xlu0 1
    %127 = vperm.xlu0 %126, %v42
    %v128 = vpop.permute.xlu0 %127
    %131 = vset.pattern.permute.xlu0 1
    %132 = vperm.xlu0 %131, %v43
    %v133 = vpop.permute.xlu0 %132
    %136 = vset.pattern.permute.xlu0 1
    %137 = vperm.xlu0 %136, %v44
    %v138 = vpop.permute.xlu0 %137
    %141 = vset.pattern.permute.xlu0 1
    %142 = vperm.xlu0 %141, %v45
    %v143 = vpop.permute.xlu0 %142
    %146 = vset.pattern.permute.xlu0 1
    %147 = vperm.xlu0 %146, %v46
    %v148 = vpop.permute.xlu0 %147
    %151 = vset.pattern.permute.xlu0 1
    %152 = vperm.xlu0 %151, %v47
    %v153 = vpop.permute.xlu0 %152
    %156 = vset.pattern.permute.xlu0 1
    %157 = vperm.xlu0 %156, %v48
    %v158 = vpop.permute.xlu0 %157
    %v160 = vsel %vm119, %v123, %v110
    %v161 = vsel %vm119, %v128, %v111
    %v162 = vsel %vm119, %v133, %v112
    %v163 = vsel %vm119, %v138, %v113
    %v164 = vsel %vm119, %v143, %v114
    %v165 = vsel %vm119, %v148, %v115
    %v166 = vsel %vm119, %v153, %v116
    %v167 = vsel %vm119, %v158, %v117
    %168 = vset.pattern.permute.xlu0 0
    %169 = vperm.xlu0 %168, %v41
    %v170 = vpop.permute.xlu0 %169
    %172 = vset.pattern.permute.xlu0 0
    %173 = vperm.xlu0 %172, %v42
    %v174 = vpop.permute.xlu0 %173
    %176 = vset.pattern.permute.xlu0 0
    %177 = vperm.xlu0 %176, %v43
    %v178 = vpop.permute.xlu0 %177
    %180 = vset.pattern.permute.xlu0 0
    %181 = vperm.xlu0 %180, %v44
    %v182 = vpop.permute.xlu0 %181
    %184 = vset.pattern.permute.xlu0 0
    %185 = vperm.xlu0 %184, %v45
    %v186 = vpop.permute.xlu0 %185
    %188 = vset.pattern.permute.xlu0 0
    %189 = vperm.xlu0 %188, %v46
    %v190 = vpop.permute.xlu0 %189
    %192 = vset.pattern.permute.xlu0 0
    %193 = vperm.xlu0 %192, %v47
    %v194 = vpop.permute.xlu0 %193
    %196 = vset.pattern.permute.xlu0 0
    %197 = vperm.xlu0 %196, %v48
    %v198 = vpop.permute.xlu0 %197
    %v200 = vsel %vm118, %v170, %v160
    %v201 = vsel %vm118, %v174, %v161
    %v202 = vsel %vm118, %v178, %v162
    %v203 = vsel %vm118, %v182, %v163
    %v204 = vsel %vm118, %v186, %v164
    %v205 = vsel %vm118, %v190, %v165
    %v206 = vsel %vm118, %v194, %v166
    %v207 = vsel %vm118, %v198, %v167
    %v209 = vlaneseq
    %v210 = vshrl.u32 %v209, 7
    %v211 = vsub.s32 0, %v210
    %v212 = vrot.slane %v51, %v211
    %v213 = vlaneseq
    %v214 = vshrl.u32 %v213, 7
    %v215 = vsub.s32 1, %v214
    %v216 = vrot.slane %v51, %v215
    %vm219 = vcmask 64512
    %v221 = vsel %vm219, %v200, 0
    %v224 = vsel %vm219, %v201, 0
    %v227 = vsel %vm219, %v202, 0
    %v230 = vsel %vm219, %v203, 0
    %v233 = vsel %vm219, %v204, 0
    %v236 = vsel %vm219, %v205, 0
    %v239 = vsel %vm219, %v206, 0
    %v242 = vsel %vm219, %v207, 0
    %244 = vmatprep.subr.mxu0 0.0
    %245 = vmatpush1.msra.mxu0 0.0
    %246 = vmatprep.subr.mxu0 0.0
    %247 = vmatpush1.msra.mxu0 0.0
    %248 = vmatprep.subr.mxu0 0.0
    %249 = vmatpush1.msra.mxu0 0.0
    %250 = vmatprep.subr.mxu0 0.0
    %251 = vmatpush1.msra.mxu0 0.0
    %252 = vmatprep.subr.mxu0 0.0
    %253 = vmatpush1.msra.mxu0 0.0
    %254 = vmatprep.subr.mxu0 0.0
    %255 = vmatpush1.msra.mxu0 0.0
    %256 = vmatprep.subr.mxu0 0.0
    %257 = vmatpush1.msra.mxu0 0.0
    %258 = vmatprep.subr.mxu0 0.0
    %259 = vmatpush1.msra.mxu0 0.0
    %260 = vmatprep.subr.mxu0 0.0
    %261 = vmatpush1.msra.mxu0 0.0
    %262 = vmatprep.subr.mxu0 0.0
    %263 = vmatpush1.msra.mxu0 0.0
    %264 = vmatprep.subr.mxu0 0.0
    %265 = vmatpush1.msra.mxu0 0.0
    %266 = vmatprep.subr.mxu0 0.0
    %267 = vmatpush1.msra.mxu0 0.0
    %268 = vmatprep.subr.mxu0 0.0
    %269 = vmatpush1.msra.mxu0 0.0
    %270 = vmatprep.subr.mxu0 0.0
    %271 = vmatpush1.msra.mxu0 0.0
    %272 = vmatprep.subr.mxu0 0.0
    %273 = vmatpush1.msra.mxu0 0.0
    %274 = vmatprep.subr.mxu0 %v50
    %275 = vmatpush1.msra.mxu0 %v49
    %276 = vmatprep.subr.mxu0 0.0
    %277 = vmatpush2.msra.mxu0 0.0
    %278 = vmatprep.subr.mxu0 0.0
    %279 = vmatpush2.msra.mxu0 0.0
    %280 = vmatprep.subr.mxu0 0.0
    %281 = vmatpush2.msra.mxu0 0.0
    %282 = vmatprep.subr.mxu0 0.0
    %283 = vmatpush2.msra.mxu0 0.0
    %284 = vmatprep.subr.mxu0 0.0
    %285 = vmatpush2.msra.mxu0 0.0
    %286 = vmatprep.subr.mxu0 0.0
    %287 = vmatpush2.msra.mxu0 0.0
    %288 = vmatprep.subr.mxu0 0.0
    %289 = vmatpush2.msra.mxu0 0.0
    %290 = vmatprep.subr.mxu0 0.0
    %291 = vmatpush2.msra.mxu0 0.0
    %292 = vmatprep.subr.mxu0 0.0
    %293 = vmatpush2.msra.mxu0 0.0
    %294 = vmatprep.subr.mxu0 0.0
    %295 = vmatpush2.msra.mxu0 0.0
    %296 = vmatprep.subr.mxu0 0.0
    %297 = vmatpush2.msra.mxu0 0.0
    %298 = vmatprep.subr.mxu0 0.0
    %299 = vmatpush2.msra.mxu0 0.0
    %300 = vmatprep.subr.mxu0 0.0
    %301 = vmatpush2.msra.mxu0 0.0
    %302 = vmatprep.subr.mxu0 0.0
    %303 = vmatpush2.msra.mxu0 0.0
    %304 = vmatprep.subr.mxu0 0.0
    %305 = vmatpush2.msra.mxu0 0.0
    %306 = vmatprep.subr.mxu0 0.0
    %307 = vmatpush2.msra.mxu0 0.0
    %308 = vmatprep.mubr.f32.mxu0 0.0
    %309 = vmatmul.mubr.f32.gmra.mxu0 %v221
    %v310 = vpop.f32.mrf.mxu0
    %v311 = vadd.f32 %v212, %v310
    %v312 = vpop.f32.mrf.mxu0
    %v313 = vadd.f32 %v216, %v312
    %314 = vmatprep.mubr.f32.mxu0 0.0
    %315 = vmatmul.mubr.f32.gmra.mxu0 %v224
    %v316 = vpop.f32.mrf.mxu0
    %v317 = vadd.f32 %v212, %v316
    %v318 = vpop.f32.mrf.mxu0
    %v319 = vadd.f32 %v216, %v318
    %320 = vmatprep.mubr.f32.mxu0 0.0
    %321 = vmatmul.mubr.f32.gmra.mxu0 %v227
    %v322 = vpop.f32.mrf.mxu0
    %v323 = vadd.f32 %v212, %v322
    %v324 = vpop.f32.mrf.mxu0
    %v325 = vadd.f32 %v216, %v324
    %326 = vmatprep.mubr.f32.mxu0 0.0
    %327 = vmatmul.mubr.f32.gmra.mxu0 %v230
    %v328 = vpop.f32.mrf.mxu0
    %v329 = vadd.f32 %v212, %v328
    %v330 = vpop.f32.mrf.mxu0
    %v331 = vadd.f32 %v216, %v330
    %332 = vmatprep.mubr.f32.mxu0 0.0
    %333 = vmatmul.mubr.f32.gmra.mxu0 %v233
    %v334 = vpop.f32.mrf.mxu0
    %v335 = vadd.f32 %v212, %v334
    %v336 = vpop.f32.mrf.mxu0
    %v337 = vadd.f32 %v216, %v336
    %338 = vmatprep.mubr.f32.mxu0 0.0
    %339 = vmatmul.mubr.f32.gmra.mxu0 %v236
    %v340 = vpop.f32.mrf.mxu0
    %v341 = vadd.f32 %v212, %v340
    %v342 = vpop.f32.mrf.mxu0
    %v343 = vadd.f32 %v216, %v342
    %344 = vmatprep.mubr.f32.mxu0 0.0
    %345 = vmatmul.mubr.f32.gmra.mxu0 %v239
    %v346 = vpop.f32.mrf.mxu0
    %v347 = vadd.f32 %v212, %v346
    %v348 = vpop.f32.mrf.mxu0
    %v349 = vadd.f32 %v216, %v348
    %350 = vmatprep.mubr.f32.mxu0 0.0
    %351 = vmatmul.mubr.f32.gmra.mxu0 %v242
    %v352 = vpop.f32.mrf.mxu0
    %v353 = vadd.f32 %v212, %v352
    %v354 = vpop.f32.mrf.mxu0
    %v355 = vadd.f32 %v216, %v354
    %356 = vdwg.mxu0
    %357 = vst [vmem:[#allocation2] sm:$0xff] %v311
    %358 = vst [vmem:[#allocation2 + $0x8] sm:$0xff] %v313
    %359 = vst [vmem:[#allocation2 + $0x10] sm:$0xff] %v317
    %360 = vst [vmem:[#allocation2 + $0x18] sm:$0xff] %v319
    %361 = vst [vmem:[#allocation2 + $0x20] sm:$0xff] %v323
    %362 = vst [vmem:[#allocation2 + $0x28] sm:$0xff] %v325
    %363 = vst [vmem:[#allocation2 + $0x30] sm:$0xff] %v329
    %364 = vst [vmem:[#allocation2 + $0x38] sm:$0xff] %v331
    %365 = vst [vmem:[#allocation2 + $0x40] sm:$0xff] %v335
    %366 = vst [vmem:[#allocation2 + $0x48] sm:$0xff] %v337
    %367 = vst [vmem:[#allocation2 + $0x50] sm:$0xff] %v341
    %368 = vst [vmem:[#allocation2 + $0x58] sm:$0xff] %v343
    %369 = vst [vmem:[#allocation2 + $0x60] sm:$0xff] %v347
    %370 = vst [vmem:[#allocation2 + $0x68] sm:$0xff] %v349
    %371 = vst [vmem:[#allocation2 + $0x70] sm:$0xff] %v353
    %372 = vst [vmem:[#allocation2 + $0x78] sm:$0xff] %v355
    %s373 = smul.u32 0, 2
    %s374 = smul.addr %s373, 8
    %s375 = scalar_lea.vmem [#allocation2], %s374
    %v376 = vld [vmem:[%s375] sm:$0xff]
    %v377 = vld [vmem:[%s375 + $0x8] sm:$0xff]
    %vm378 = vcmask 523264
    %v380 = vsel %vm378, 0.0, 0
    %382 = vmatprep.subr.mxu0 0.0
    %383 = vmatpush1.msra.mxu0 0.0
    %384 = vmatprep.subr.mxu0 0.0
    %385 = vmatpush1.msra.mxu0 0.0
    %386 = vmatprep.subr.mxu0 0.0
    %387 = vmatpush1.msra.mxu0 0.0
    %388 = vmatprep.subr.mxu0 0.0
    %389 = vmatpush1.msra.mxu0 0.0
    %390 = vmatprep.subr.mxu0 0.0
    %391 = vmatpush1.msra.mxu0 0.0
    %392 = vmatprep.subr.mxu0 0.0
    %393 = vmatpush1.msra.mxu0 0.0
    %394 = vmatprep.subr.mxu0 0.0
    %395 = vmatpush1.msra.mxu0 0.0
    %396 = vmatprep.subr.mxu0 0.0
    %397 = vmatpush1.msra.mxu0 0.0
    %398 = vmatprep.subr.mxu0 %v67
    %399 = vmatpush1.msra.mxu0 %v66
    %400 = vmatprep.subr.mxu0 %v65
    %401 = vmatpush1.msra.mxu0 %v64
    %402 = vmatprep.subr.mxu0 %v63
    %403 = vmatpush1.msra.mxu0 %v62
    %404 = vmatprep.subr.mxu0 %v61
    %405 = vmatpush1.msra.mxu0 %v60
    %406 = vmatprep.subr.mxu0 %v59
    %407 = vmatpush1.msra.mxu0 %v58
    %408 = vmatprep.subr.mxu0 %v57
    %409 = vmatpush1.msra.mxu0 %v56
    %410 = vmatprep.subr.mxu0 %v55
    %411 = vmatpush1.msra.mxu0 %v54
    %412 = vmatprep.subr.mxu0 %v53
    %413 = vmatpush1.msra.mxu0 %v52
    %414 = vmatprep.subr.mxu0 0.0
    %415 = vmatpush2.msra.mxu0 0.0
    %416 = vmatprep.subr.mxu0 0.0
    %417 = vmatpush2.msra.mxu0 0.0
    %418 = vmatprep.subr.mxu0 0.0
    %419 = vmatpush2.msra.mxu0 0.0
    %420 = vmatprep.subr.mxu0 0.0
    %421 = vmatpush2.msra.mxu0 0.0
    %422 = vmatprep.subr.mxu0 0.0
    %423 = vmatpush2.msra.mxu0 0.0
    %424 = vmatprep.subr.mxu0 0.0
    %425 = vmatpush2.msra.mxu0 0.0
    %426 = vmatprep.subr.mxu0 0.0
    %427 = vmatpush2.msra.mxu0 0.0
    %428 = vmatprep.subr.mxu0 0.0
    %429 = vmatpush2.msra.mxu0 0.0
    %430 = vmatprep.subr.mxu0 0.0
    %431 = vmatpush2.msra.mxu0 0.0
    %432 = vmatprep.subr.mxu0 0.0
    %433 = vmatpush2.msra.mxu0 0.0
    %434 = vmatprep.subr.mxu0 0.0
    %435 = vmatpush2.msra.mxu0 0.0
    %436 = vmatprep.subr.mxu0 0.0
    %437 = vmatpush2.msra.mxu0 0.0
    %438 = vmatprep.subr.mxu0 0.0
    %439 = vmatpush2.msra.mxu0 0.0
    %440 = vmatprep.subr.mxu0 0.0
    %441 = vmatpush2.msra.mxu0 0.0
    %442 = vmatprep.subr.mxu0 0.0
    %443 = vmatpush2.msra.mxu0 0.0
    %444 = vmatprep.subr.mxu0 0.0
    %445 = vmatpush2.msra.mxu0 0.0
    %446 = vmatprep.mubr.f32.mxu0 0.0
    %447 = vmatmul.mubr.f32.gmra.mxu0 %v380
    %v448 = vpop.f32.mrf.mxu0
    %v449 = vadd.f32 0.0, %v448
    %v450 = vpop.f32.mrf.mxu0
    %v451 = vadd.f32 0.0, %v450
    %452 = vdwg.mxu0
    %v453 = vadd.f32 %v376, %v449
    %v454 = vadd.f32 %v377, %v451
    %v455 = vxor.u32 %v453, 2147483648
    %v456 = vmul.f32 %v455, 1.442695
    %v457 = vpow.pop %v456
    %v458 = vadd.f32 %v457, 1.0
    %v459 = vrcp.pop %v458
    %v460 = vmul.f32 1.0, %v459
    %v461 = vtanh.pop %v454
    %v462 = vxor.u32 %v454, 2147483648
    %v463 = vmul.f32 %v462, 1.442695
    %v464 = vpow.pop %v463
    %v465 = vadd.f32 %v464, 1.0
    %v466 = vrcp.pop %v465
    %v467 = vmul.f32 1.0, %v466
    %v468 = vmul.f32 %v460, 0.0
    %v469 = vmul.f32 %v460, %v461
    %471 = vrot.lane.b32.xlu0 %v469, 64
    %v472 = vpop.permute.xlu0 %471
    %v474 = vadd.f32 %v468, %v472
    %v475 = vtanh.pop %v474
    %v476 = vmul.f32 %v467, %v475
    %s477 = smul.u32 1, 2
    %s478 = smul.addr %s477, 8
    %s479 = scalar_lea.vmem [#allocation2], %s478
    %v480 = vld [vmem:[%s479] sm:$0xff]
    %v481 = vld [vmem:[%s479 + $0x8] sm:$0xff]
    %483 = vrot.lane.b32.xlu0 %v476, 64
    %v484 = vpop.permute.xlu0 %483
    %v485 = vsel %vm378, %v484, 0
    %487 = vmatprep.subr.mxu0 0.0
    %488 = vmatpush1.msra.mxu0 0.0
    %489 = vmatprep.subr.mxu0 0.0
    %490 = vmatpush1.msra.mxu0 0.0
    %491 = vmatprep.subr.mxu0 0.0
    %492 = vmatpush1.msra.mxu0 0.0
    %493 = vmatprep.subr.mxu0 0.0
    %494 = vmatpush1.msra.mxu0 0.0
    %495 = vmatprep.subr.mxu0 0.0
    %496 = vmatpush1.msra.mxu0 0.0
    %497 = vmatprep.subr.mxu0 0.0
    %498 = vmatpush1.msra.mxu0 0.0
    %499 = vmatprep.subr.mxu0 0.0
    %500 = vmatpush1.msra.mxu0 0.0
    %501 = vmatprep.subr.mxu0 0.0
    %502 = vmatpush1.msra.mxu0 0.0
    %503 = vmatprep.subr.mxu0 %v67
    %504 = vmatpush1.msra.mxu0 %v66
    %505 = vmatprep.subr.mxu0 %v65
    %506 = vmatpush1.msra.mxu0 %v64
    %507 = vmatprep.subr.mxu0 %v63
    %508 = vmatpush1.msra.mxu0 %v62
    %509 = vmatprep.subr.mxu0 %v61
    %510 = vmatpush1.msra.mxu0 %v60
    %511 = vmatprep.subr.mxu0 %v59
    %512 = vmatpush1.msra.mxu0 %v58
    %513 = vmatprep.subr.mxu0 %v57
    %514 = vmatpush1.msra.mxu0 %v56
    %515 = vmatprep.subr.mxu0 %v55
    %516 = vmatpush1.msra.mxu0 %v54
    %517 = vmatprep.subr.mxu0 %v53
    %518 = vmatpush1.msra.mxu0 %v52
    %519 = vmatprep.subr.mxu0 0.0
    %520 = vmatpush2.msra.mxu0 0.0
    %521 = vmatprep.subr.mxu0 0.0
    %522 = vmatpush2.msra.mxu0 0.0
    %523 = vmatprep.subr.mxu0 0.0
    %524 = vmatpush2.msra.mxu0 0.0
    %525 = vmatprep.subr.mxu0 0.0
    %526 = vmatpush2.msra.mxu0 0.0
    %527 = vmatprep.subr.mxu0 0.0
    %528 = vmatpush2.msra.mxu0 0.0
    %529 = vmatprep.subr.mxu0 0.0
    %530 = vmatpush2.msra.mxu0 0.0
    %531 = vmatprep.subr.mxu0 0.0
    %532 = vmatpush2.msra.mxu0 0.0
    %533 = vmatprep.subr.mxu0 0.0
    %534 = vmatpush2.msra.mxu0 0.0
    %535 = vmatprep.subr.mxu0 0.0
    %536 = vmatpush2.msra.mxu0 0.0
    %537 = vmatprep.subr.mxu0 0.0
    %538 = vmatpush2.msra.mxu0 0.0
    %539 = vmatprep.subr.mxu0 0.0
    %540 = vmatpush2.msra.mxu0 0.0
    %541 = vmatprep.subr.mxu0 0.0
    %542 = vmatpush2.msra.mxu0 0.0
    %543 = vmatprep.subr.mxu0 0.0
    %544 = vmatpush2.msra.mxu0 0.0
    %545 = vmatprep.subr.mxu0 0.0
    %546 = vmatpush2.msra.mxu0 0.0
    %547 = vmatprep.subr.mxu0 0.0
    %548 = vmatpush2.msra.mxu0 0.0
    %549 = vmatprep.subr.mxu0 0.0
    %550 = vmatpush2.msra.mxu0 0.0
    %551 = vmatprep.mubr.f32.mxu0 0.0
    %552 = vmatmul.mubr.f32.gmra.mxu0 %v485
    %v553 = vpop.f32.mrf.mxu0
    %v554 = vadd.f32 0.0, %v553
    %v555 = vpop.f32.mrf.mxu0
    %v556 = vadd.f32 0.0, %v555
    %557 = vdwg.mxu0
    %v558 = vadd.f32 %v480, %v554
    %v559 = vadd.f32 %v481, %v556
    %v560 = vxor.u32 %v558, 2147483648
    %v561 = vmul.f32 %v560, 1.442695
    %v562 = vpow.pop %v561
    %v563 = vadd.f32 %v562, 1.0
    %v564 = vrcp.pop %v563
    %v565 = vmul.f32 1.0, %v564
    %v566 = vtanh.pop %v559
    %v567 = vxor.u32 %v559, 2147483648
    %v568 = vmul.f32 %v567, 1.442695
    %v569 = vpow.pop %v568
    %v570 = vadd.f32 %v569, 1.0
    %v571 = vrcp.pop %v570
    %v572 = vmul.f32 1.0, %v571
    %v573 = vmul.f32 %v565, %v474
    %v574 = vmul.f32 %v565, %v566
    %576 = vrot.lane.b32.xlu0 %v574, 64
    %v577 = vpop.permute.xlu0 %576
    %v579 = vadd.f32 %v573, %v577
    %v580 = vtanh.pop %v579
    %v581 = vmul.f32 %v572, %v580
    %s582 = smul.u32 2, 2
    %s583 = smul.addr %s582, 8
    %s584 = scalar_lea.vmem [#allocation2], %s583
    %v585 = vld [vmem:[%s584] sm:$0xff]
    %v586 = vld [vmem:[%s584 + $0x8] sm:$0xff]
    %588 = vrot.lane.b32.xlu0 %v581, 64
    %v589 = vpop.permute.xlu0 %588
    %v590 = vsel %vm378, %v589, 0
    %592 = vmatprep.subr.mxu0 0.0
    %593 = vmatpush1.msra.mxu0 0.0
    %594 = vmatprep.subr.mxu0 0.0
    %595 = vmatpush1.msra.mxu0 0.0
    %596 = vmatprep.subr.mxu0 0.0
    %597 = vmatpush1.msra.mxu0 0.0
    %598 = vmatprep.subr.mxu0 0.0
    %599 = vmatpush1.msra.mxu0 0.0
    %600 = vmatprep.subr.mxu0 0.0
    %601 = vmatpush1.msra.mxu0 0.0
    %602 = vmatprep.subr.mxu0 0.0
    %603 = vmatpush1.msra.mxu0 0.0
    %604 = vmatprep.subr.mxu0 0.0
    %605 = vmatpush1.msra.mxu0 0.0
    %606 = vmatprep.subr.mxu0 0.0
    %607 = vmatpush1.msra.mxu0 0.0
    %608 = vmatprep.subr.mxu0 %v67
    %609 = vmatpush1.msra.mxu0 %v66
    %610 = vmatprep.subr.mxu0 %v65
    %611 = vmatpush1.msra.mxu0 %v64
    %612 = vmatprep.subr.mxu0 %v63
    %613 = vmatpush1.msra.mxu0 %v62
    %614 = vmatprep.subr.mxu0 %v61
    %615 = vmatpush1.msra.mxu0 %v60
    %616 = vmatprep.subr.mxu0 %v59
    %617 = vmatpush1.msra.mxu0 %v58
    %618 = vmatprep.subr.mxu0 %v57
    %619 = vmatpush1.msra.mxu0 %v56
    %620 = vmatprep.subr.mxu0 %v55
    %621 = vmatpush1.msra.mxu0 %v54
    %622 = vmatprep.subr.mxu0 %v53
    %623 = vmatpush1.msra.mxu0 %v52
    %624 = vmatprep.subr.mxu0 0.0
    %625 = vmatpush2.msra.mxu0 0.0
    %626 = vmatprep.subr.mxu0 0.0
    %627 = vmatpush2.msra.mxu0 0.0
    %628 = vmatprep.subr.mxu0 0.0
    %629 = vmatpush2.msra.mxu0 0.0
    %630 = vmatprep.subr.mxu0 0.0
    %631 = vmatpush2.msra.mxu0 0.0
    %632 = vmatprep.subr.mxu0 0.0
    %633 = vmatpush2.msra.mxu0 0.0
    %634 = vmatprep.subr.mxu0 0.0
    %635 = vmatpush2.msra.mxu0 0.0
    %636 = vmatprep.subr.mxu0 0.0
    %637 = vmatpush2.msra.mxu0 0.0
    %638 = vmatprep.subr.mxu0 0.0
    %639 = vmatpush2.msra.mxu0 0.0
    %640 = vmatprep.subr.mxu0 0.0
    %641 = vmatpush2.msra.mxu0 0.0
    %642 = vmatprep.subr.mxu0 0.0
    %643 = vmatpush2.msra.mxu0 0.0
    %644 = vmatprep.subr.mxu0 0.0
    %645 = vmatpush2.msra.mxu0 0.0
    %646 = vmatprep.subr.mxu0 0.0
    %647 = vmatpush2.msra.mxu0 0.0
    %648 = vmatprep.subr.mxu0 0.0
    %649 = vmatpush2.msra.mxu0 0.0
    %650 = vmatprep.subr.mxu0 0.0
    %651 = vmatpush2.msra.mxu0 0.0
    %652 = vmatprep.subr.mxu0 0.0
    %653 = vmatpush2.msra.mxu0 0.0
    %654 = vmatprep.subr.mxu0 0.0
    %655 = vmatpush2.msra.mxu0 0.0
    %656 = vmatprep.mubr.f32.mxu0 0.0
    %657 = vmatmul.mubr.f32.gmra.mxu0 %v590
    %v658 = vpop.f32.mrf.mxu0
    %v659 = vadd.f32 0.0, %v658
    %v660 = vpop.f32.mrf.mxu0
    %v661 = vadd.f32 0.0, %v660
    %662 = vdwg.mxu0
    %v663 = vadd.f32 %v585, %v659
    %v664 = vadd.f32 %v586, %v661
    %v665 = vxor.u32 %v663, 2147483648
    %v666 = vmul.f32 %v665, 1.442695
    %v667 = vpow.pop %v666
    %v668 = vadd.f32 %v667, 1.0
    %v669 = vrcp.pop %v668
    %v670 = vmul.f32 1.0, %v669
    %v671 = vtanh.pop %v664
    %v672 = vxor.u32 %v664, 2147483648
    %v673 = vmul.f32 %v672, 1.442695
    %v674 = vpow.pop %v673
    %v675 = vadd.f32 %v674, 1.0
    %v676 = vrcp.pop %v675
    %v677 = vmul.f32 1.0, %v676
    %v678 = vmul.f32 %v670, %v579
    %v679 = vmul.f32 %v670, %v671
    %681 = vrot.lane.b32.xlu0 %v679, 64
    %v682 = vpop.permute.xlu0 %681
    %v684 = vadd.f32 %v678, %v682
    %v685 = vtanh.pop %v684
    %v686 = vmul.f32 %v677, %v685
    %s687 = smul.u32 3, 2
    %s688 = smul.addr %s687, 8
    %s689 = scalar_lea.vmem [#allocation2], %s688
    %v690 = vld [vmem:[%s689] sm:$0xff]
    %v691 = vld [vmem:[%s689 + $0x8] sm:$0xff]
    %693 = vrot.lane.b32.xlu0 %v686, 64
    %v694 = vpop.permute.xlu0 %693
    %v695 = vsel %vm378, %v694, 0
    %697 = vmatprep.subr.mxu0 0.0
    %698 = vmatpush1.msra.mxu0 0.0
    %699 = vmatprep.subr.mxu0 0.0
    %700 = vmatpush1.msra.mxu0 0.0
    %701 = vmatprep.subr.mxu0 0.0
    %702 = vmatpush1.msra.mxu0 0.0
    %703 = vmatprep.subr.mxu0 0.0
    %704 = vmatpush1.msra.mxu0 0.0
    %705 = vmatprep.subr.mxu0 0.0
    %706 = vmatpush1.msra.mxu0 0.0
    %707 = vmatprep.subr.mxu0 0.0
    %708 = vmatpush1.msra.mxu0 0.0
    %709 = vmatprep.subr.mxu0 0.0
    %710 = vmatpush1.msra.mxu0 0.0
    %711 = vmatprep.subr.mxu0 0.0
    %712 = vmatpush1.msra.mxu0 0.0
    %713 = vmatprep.subr.mxu0 %v67
    %714 = vmatpush1.msra.mxu0 %v66
    %715 = vmatprep.subr.mxu0 %v65
    %716 = vmatpush1.msra.mxu0 %v64
    %717 = vmatprep.subr.mxu0 %v63
    %718 = vmatpush1.msra.mxu0 %v62
    %719 = vmatprep.subr.mxu0 %v61
    %720 = vmatpush1.msra.mxu0 %v60
    %721 = vmatprep.subr.mxu0 %v59
    %722 = vmatpush1.msra.mxu0 %v58
    %723 = vmatprep.subr.mxu0 %v57
    %724 = vmatpush1.msra.mxu0 %v56
    %725 = vmatprep.subr.mxu0 %v55
    %726 = vmatpush1.msra.mxu0 %v54
    %727 = vmatprep.subr.mxu0 %v53
    %728 = vmatpush1.msra.mxu0 %v52
    %729 = vmatprep.subr.mxu0 0.0
    %730 = vmatpush2.msra.mxu0 0.0
    %731 = vmatprep.subr.mxu0 0.0
    %732 = vmatpush2.msra.mxu0 0.0
    %733 = vmatprep.subr.mxu0 0.0
    %734 = vmatpush2.msra.mxu0 0.0
    %735 = vmatprep.subr.mxu0 0.0
    %736 = vmatpush2.msra.mxu0 0.0
    %737 = vmatprep.subr.mxu0 0.0
    %738 = vmatpush2.msra.mxu0 0.0
    %739 = vmatprep.subr.mxu0 0.0
    %740 = vmatpush2.msra.mxu0 0.0
    %741 = vmatprep.subr.mxu0 0.0
    %742 = vmatpush2.msra.mxu0 0.0
    %743 = vmatprep.subr.mxu0 0.0
    %744 = vmatpush2.msra.mxu0 0.0
    %745 = vmatprep.subr.mxu0 0.0
    %746 = vmatpush2.msra.mxu0 0.0
    %747 = vmatprep.subr.mxu0 0.0
    %748 = vmatpush2.msra.mxu0 0.0
    %749 = vmatprep.subr.mxu0 0.0
    %750 = vmatpush2.msra.mxu0 0.0
    %751 = vmatprep.subr.mxu0 0.0
    %752 = vmatpush2.msra.mxu0 0.0
    %753 = vmatprep.subr.mxu0 0.0
    %754 = vmatpush2.msra.mxu0 0.0
    %755 = vmatprep.subr.mxu0 0.0
    %756 = vmatpush2.msra.mxu0 0.0
    %757 = vmatprep.subr.mxu0 0.0
    %758 = vmatpush2.msra.mxu0 0.0
    %759 = vmatprep.subr.mxu0 0.0
    %760 = vmatpush2.msra.mxu0 0.0
    %761 = vmatprep.mubr.f32.mxu0 0.0
    %762 = vmatmul.mubr.f32.gmra.mxu0 %v695
    %v763 = vpop.f32.mrf.mxu0
    %v764 = vadd.f32 0.0, %v763
    %v765 = vpop.f32.mrf.mxu0
    %v766 = vadd.f32 0.0, %v765
    %767 = vdwg.mxu0
    %v768 = vadd.f32 %v690, %v764
    %v769 = vadd.f32 %v691, %v766
    %v770 = vxor.u32 %v768, 2147483648
    %v771 = vmul.f32 %v770, 1.442695
    %v772 = vpow.pop %v771
    %v773 = vadd.f32 %v772, 1.0
    %v774 = vrcp.pop %v773
    %v775 = vmul.f32 1.0, %v774
    %v776 = vtanh.pop %v769
    %v777 = vxor.u32 %v769, 2147483648
    %v778 = vmul.f32 %v777, 1.442695
    %v779 = vpow.pop %v778
    %v780 = vadd.f32 %v779, 1.0
    %v781 = vrcp.pop %v780
    %v782 = vmul.f32 1.0, %v781
    %v783 = vmul.f32 %v775, %v684
    %v784 = vmul.f32 %v775, %v776
    %786 = vrot.lane.b32.xlu0 %v784, 64
    %v787 = vpop.permute.xlu0 %786
    %v789 = vadd.f32 %v783, %v787
    %v790 = vtanh.pop %v789
    %v791 = vmul.f32 %v782, %v790
    %s792 = smul.u32 4, 2
    %s793 = smul.addr %s792, 8
    %s794 = scalar_lea.vmem [#allocation2], %s793
    %v795 = vld [vmem:[%s794] sm:$0xff]
    %v796 = vld [vmem:[%s794 + $0x8] sm:$0xff]
    %798 = vrot.lane.b32.xlu0 %v791, 64
    %v799 = vpop.permute.xlu0 %798
    %v800 = vsel %vm378, %v799, 0
    %802 = vmatprep.subr.mxu0 0.0
    %803 = vmatpush1.msra.mxu0 0.0
    %804 = vmatprep.subr.mxu0 0.0
    %805 = vmatpush1.msra.mxu0 0.0
    %806 = vmatprep.subr.mxu0 0.0
    %807 = vmatpush1.msra.mxu0 0.0
    %808 = vmatprep.subr.mxu0 0.0
    %809 = vmatpush1.msra.mxu0 0.0
    %810 = vmatprep.subr.mxu0 0.0
    %811 = vmatpush1.msra.mxu0 0.0
    %812 = vmatprep.subr.mxu0 0.0
    %813 = vmatpush1.msra.mxu0 0.0
    %814 = vmatprep.subr.mxu0 0.0
    %815 = vmatpush1.msra.mxu0 0.0
    %816 = vmatprep.subr.mxu0 0.0
    %817 = vmatpush1.msra.mxu0 0.0
    %818 = vmatprep.subr.mxu0 %v67
    %819 = vmatpush1.msra.mxu0 %v66
    %820 = vmatprep.subr.mxu0 %v65
    %821 = vmatpush1.msra.mxu0 %v64
    %822 = vmatprep.subr.mxu0 %v63
    %823 = vmatpush1.msra.mxu0 %v62
    %824 = vmatprep.subr.mxu0 %v61
    %825 = vmatpush1.msra.mxu0 %v60
    %826 = vmatprep.subr.mxu0 %v59
    %827 = vmatpush1.msra.mxu0 %v58
    %828 = vmatprep.subr.mxu0 %v57
    %829 = vmatpush1.msra.mxu0 %v56
    %830 = vmatprep.subr.mxu0 %v55
    %831 = vmatpush1.msra.mxu0 %v54
    %832 = vmatprep.subr.mxu0 %v53
    %833 = vmatpush1.msra.mxu0 %v52
    %834 = vmatprep.subr.mxu0 0.0
    %835 = vmatpush2.msra.mxu0 0.0
    %836 = vmatprep.subr.mxu0 0.0
    %837 = vmatpush2.msra.mxu0 0.0
    %838 = vmatprep.subr.mxu0 0.0
    %839 = vmatpush2.msra.mxu0 0.0
    %840 = vmatprep.subr.mxu0 0.0
    %841 = vmatpush2.msra.mxu0 0.0
    %842 = vmatprep.subr.mxu0 0.0
    %843 = vmatpush2.msra.mxu0 0.0
    %844 = vmatprep.subr.mxu0 0.0
    %845 = vmatpush2.msra.mxu0 0.0
    %846 = vmatprep.subr.mxu0 0.0
    %847 = vmatpush2.msra.mxu0 0.0
    %848 = vmatprep.subr.mxu0 0.0
    %849 = vmatpush2.msra.mxu0 0.0
    %850 = vmatprep.subr.mxu0 0.0
    %851 = vmatpush2.msra.mxu0 0.0
    %852 = vmatprep.subr.mxu0 0.0
    %853 = vmatpush2.msra.mxu0 0.0
    %854 = vmatprep.subr.mxu0 0.0
    %855 = vmatpush2.msra.mxu0 0.0
    %856 = vmatprep.subr.mxu0 0.0
    %857 = vmatpush2.msra.mxu0 0.0
    %858 = vmatprep.subr.mxu0 0.0
    %859 = vmatpush2.msra.mxu0 0.0
    %860 = vmatprep.subr.mxu0 0.0
    %861 = vmatpush2.msra.mxu0 0.0
    %862 = vmatprep.subr.mxu0 0.0
    %863 = vmatpush2.msra.mxu0 0.0
    %864 = vmatprep.subr.mxu0 0.0
    %865 = vmatpush2.msra.mxu0 0.0
    %866 = vmatprep.mubr.f32.mxu0 0.0
    %867 = vmatmul.mubr.f32.gmra.mxu0 %v800
    %v868 = vpop.f32.mrf.mxu0
    %v869 = vadd.f32 0.0, %v868
    %v870 = vpop.f32.mrf.mxu0
    %v871 = vadd.f32 0.0, %v870
    %872 = vdwg.mxu0
    %v873 = vadd.f32 %v795, %v869
    %v874 = vadd.f32 %v796, %v871
    %v875 = vxor.u32 %v873, 2147483648
    %v876 = vmul.f32 %v875, 1.442695
    %v877 = vpow.pop %v876
    %v878 = vadd.f32 %v877, 1.0
    %v879 = vrcp.pop %v878
    %v880 = vmul.f32 1.0, %v879
    %v881 = vtanh.pop %v874
    %v882 = vxor.u32 %v874, 2147483648
    %v883 = vmul.f32 %v882, 1.442695
    %v884 = vpow.pop %v883
    %v885 = vadd.f32 %v884, 1.0
    %v886 = vrcp.pop %v885
    %v887 = vmul.f32 1.0, %v886
    %v888 = vmul.f32 %v880, %v789
    %v889 = vmul.f32 %v880, %v881
    %891 = vrot.lane.b32.xlu0 %v889, 64
    %v892 = vpop.permute.xlu0 %891
    %v894 = vadd.f32 %v888, %v892
    %v895 = vtanh.pop %v894
    %v896 = vmul.f32 %v887, %v895
    %s897 = smul.u32 5, 2
    %s898 = smul.addr %s897, 8
    %s899 = scalar_lea.vmem [#allocation2], %s898
    %v900 = vld [vmem:[%s899] sm:$0xff]
    %v901 = vld [vmem:[%s899 + $0x8] sm:$0xff]
    %903 = vrot.lane.b32.xlu0 %v896, 64
    %v904 = vpop.permute.xlu0 %903
    %v905 = vsel %vm378, %v904, 0
    %907 = vmatprep.subr.mxu0 0.0
    %908 = vmatpush1.msra.mxu0 0.0
    %909 = vmatprep.subr.mxu0 0.0
    %910 = vmatpush1.msra.mxu0 0.0
    %911 = vmatprep.subr.mxu0 0.0
    %912 = vmatpush1.msra.mxu0 0.0
    %913 = vmatprep.subr.mxu0 0.0
    %914 = vmatpush1.msra.mxu0 0.0
    %915 = vmatprep.subr.mxu0 0.0
    %916 = vmatpush1.msra.mxu0 0.0
    %917 = vmatprep.subr.mxu0 0.0
    %918 = vmatpush1.msra.mxu0 0.0
    %919 = vmatprep.subr.mxu0 0.0
    %920 = vmatpush1.msra.mxu0 0.0
    %921 = vmatprep.subr.mxu0 0.0
    %922 = vmatpush1.msra.mxu0 0.0
    %923 = vmatprep.subr.mxu0 %v67
    %924 = vmatpush1.msra.mxu0 %v66
    %925 = vmatprep.subr.mxu0 %v65
    %926 = vmatpush1.msra.mxu0 %v64
    %927 = vmatprep.subr.mxu0 %v63
    %928 = vmatpush1.msra.mxu0 %v62
    %929 = vmatprep.subr.mxu0 %v61
    %930 = vmatpush1.msra.mxu0 %v60
    %931 = vmatprep.subr.mxu0 %v59
    %932 = vmatpush1.msra.mxu0 %v58
    %933 = vmatprep.subr.mxu0 %v57
    %934 = vmatpush1.msra.mxu0 %v56
    %935 = vmatprep.subr.mxu0 %v55
    %936 = vmatpush1.msra.mxu0 %v54
    %937 = vmatprep.subr.mxu0 %v53
    %938 = vmatpush1.msra.mxu0 %v52
    %939 = vmatprep.subr.mxu0 0.0
    %940 = vmatpush2.msra.mxu0 0.0
    %941 = vmatprep.subr.mxu0 0.0
    %942 = vmatpush2.msra.mxu0 0.0
    %943 = vmatprep.subr.mxu0 0.0
    %944 = vmatpush2.msra.mxu0 0.0
    %945 = vmatprep.subr.mxu0 0.0
    %946 = vmatpush2.msra.mxu0 0.0
    %947 = vmatprep.subr.mxu0 0.0
    %948 = vmatpush2.msra.mxu0 0.0
    %949 = vmatprep.subr.mxu0 0.0
    %950 = vmatpush2.msra.mxu0 0.0
    %951 = vmatprep.subr.mxu0 0.0
    %952 = vmatpush2.msra.mxu0 0.0
    %953 = vmatprep.subr.mxu0 0.0
    %954 = vmatpush2.msra.mxu0 0.0
    %955 = vmatprep.subr.mxu0 0.0
    %956 = vmatpush2.msra.mxu0 0.0
    %957 = vmatprep.subr.mxu0 0.0
    %958 = vmatpush2.msra.mxu0 0.0
    %959 = vmatprep.subr.mxu0 0.0
    %960 = vmatpush2.msra.mxu0 0.0
    %961 = vmatprep.subr.mxu0 0.0
    %962 = vmatpush2.msra.mxu0 0.0
    %963 = vmatprep.subr.mxu0 0.0
    %964 = vmatpush2.msra.mxu0 0.0
    %965 = vmatprep.subr.mxu0 0.0
    %966 = vmatpush2.msra.mxu0 0.0
    %967 = vmatprep.subr.mxu0 0.0
    %968 = vmatpush2.msra.mxu0 0.0
    %969 = vmatprep.subr.mxu0 0.0
    %970 = vmatpush2.msra.mxu0 0.0
    %971 = vmatprep.mubr.f32.mxu0 0.0
    %972 = vmatmul.mubr.f32.gmra.mxu0 %v905
    %v973 = vpop.f32.mrf.mxu0
    %v974 = vadd.f32 0.0, %v973
    %v975 = vpop.f32.mrf.mxu0
    %v976 = vadd.f32 0.0, %v975
    %977 = vdwg.mxu0
    %v978 = vadd.f32 %v900, %v974
    %v979 = vadd.f32 %v901, %v976
    %v980 = vxor.u32 %v978, 2147483648
    %v981 = vmul.f32 %v980, 1.442695
    %v982 = vpow.pop %v981
    %v983 = vadd.f32 %v982, 1.0
    %v984 = vrcp.pop %v983
    %v985 = vmul.f32 1.0, %v984
    %v986 = vtanh.pop %v979
    %v987 = vxor.u32 %v979, 2147483648
    %v988 = vmul.f32 %v987, 1.442695
    %v989 = vpow.pop %v988
    %v990 = vadd.f32 %v989, 1.0
    %v991 = vrcp.pop %v990
    %v992 = vmul.f32 1.0, %v991
    %v993 = vmul.f32 %v985, %v894
    %v994 = vmul.f32 %v985, %v986
    %996 = vrot.lane.b32.xlu0 %v994, 64
    %v997 = vpop.permute.xlu0 %996
    %v999 = vadd.f32 %v993, %v997
    %v1000 = vtanh.pop %v999
    %v1001 = vmul.f32 %v992, %v1000
    %s1002 = smul.u32 6, 2
    %s1003 = smul.addr %s1002, 8
    %s1004 = scalar_lea.vmem [#allocation2], %s1003
    %v1005 = vld [vmem:[%s1004] sm:$0xff]
    %v1006 = vld [vmem:[%s1004 + $0x8] sm:$0xff]
    %1008 = vrot.lane.b32.xlu0 %v1001, 64
    %v1009 = vpop.permute.xlu0 %1008
    %v1010 = vsel %vm378, %v1009, 0
    %1012 = vmatprep.subr.mxu0 0.0
    %1013 = vmatpush1.msra.mxu0 0.0
    %1014 = vmatprep.subr.mxu0 0.0
    %1015 = vmatpush1.msra.mxu0 0.0
    %1016 = vmatprep.subr.mxu0 0.0
    %1017 = vmatpush1.msra.mxu0 0.0
    %1018 = vmatprep.subr.mxu0 0.0
    %1019 = vmatpush1.msra.mxu0 0.0
    %1020 = vmatprep.subr.mxu0 0.0
    %1021 = vmatpush1.msra.mxu0 0.0
    %1022 = vmatprep.subr.mxu0 0.0
    %1023 = vmatpush1.msra.mxu0 0.0
    %1024 = vmatprep.subr.mxu0 0.0
    %1025 = vmatpush1.msra.mxu0 0.0
    %1026 = vmatprep.subr.mxu0 0.0
    %1027 = vmatpush1.msra.mxu0 0.0
    %1028 = vmatprep.subr.mxu0 %v67
    %1029 = vmatpush1.msra.mxu0 %v66
    %1030 = vmatprep.subr.mxu0 %v65
    %1031 = vmatpush1.msra.mxu0 %v64
    %1032 = vmatprep.subr.mxu0 %v63
    %1033 = vmatpush1.msra.mxu0 %v62
    %1034 = vmatprep.subr.mxu0 %v61
    %1035 = vmatpush1.msra.mxu0 %v60
    %1036 = vmatprep.subr.mxu0 %v59
    %1037 = vmatpush1.msra.mxu0 %v58
    %1038 = vmatprep.subr.mxu0 %v57
    %1039 = vmatpush1.msra.mxu0 %v56
    %1040 = vmatprep.subr.mxu0 %v55
    %1041 = vmatpush1.msra.mxu0 %v54
    %1042 = vmatprep.subr.mxu0 %v53
    %1043 = vmatpush1.msra.mxu0 %v52
    %1044 = vmatprep.subr.mxu0 0.0
    %1045 = vmatpush2.msra.mxu0 0.0
    %1046 = vmatprep.subr.mxu0 0.0
    %1047 = vmatpush2.msra.mxu0 0.0
    %1048 = vmatprep.subr.mxu0 0.0
    %1049 = vmatpush2.msra.mxu0 0.0
    %1050 = vmatprep.subr.mxu0 0.0
    %1051 = vmatpush2.msra.mxu0 0.0
    %1052 = vmatprep.subr.mxu0 0.0
    %1053 = vmatpush2.msra.mxu0 0.0
    %1054 = vmatprep.subr.mxu0 0.0
    %1055 = vmatpush2.msra.mxu0 0.0
    %1056 = vmatprep.subr.mxu0 0.0
    %1057 = vmatpush2.msra.mxu0 0.0
    %1058 = vmatprep.subr.mxu0 0.0
    %1059 = vmatpush2.msra.mxu0 0.0
    %1060 = vmatprep.subr.mxu0 0.0
    %1061 = vmatpush2.msra.mxu0 0.0
    %1062 = vmatprep.subr.mxu0 0.0
    %1063 = vmatpush2.msra.mxu0 0.0
    %1064 = vmatprep.subr.mxu0 0.0
    %1065 = vmatpush2.msra.mxu0 0.0
    %1066 = vmatprep.subr.mxu0 0.0
    %1067 = vmatpush2.msra.mxu0 0.0
    %1068 = vmatprep.subr.mxu0 0.0
    %1069 = vmatpush2.msra.mxu0 0.0
    %1070 = vmatprep.subr.mxu0 0.0
    %1071 = vmatpush2.msra.mxu0 0.0
    %1072 = vmatprep.subr.mxu0 0.0
    %1073 = vmatpush2.msra.mxu0 0.0
    %1074 = vmatprep.subr.mxu0 0.0
    %1075 = vmatpush2.msra.mxu0 0.0
    %1076 = vmatprep.mubr.f32.mxu0 0.0
    %1077 = vmatmul.mubr.f32.gmra.mxu0 %v1010
    %v1078 = vpop.f32.mrf.mxu0
    %v1079 = vadd.f32 0.0, %v1078
    %v1080 = vpop.f32.mrf.mxu0
    %v1081 = vadd.f32 0.0, %v1080
    %1082 = vdwg.mxu0
    %v1083 = vadd.f32 %v1005, %v1079
    %v1084 = vadd.f32 %v1006, %v1081
    %v1085 = vxor.u32 %v1083, 2147483648
    %v1086 = vmul.f32 %v1085, 1.442695
    %v1087 = vpow.pop %v1086
    %v1088 = vadd.f32 %v1087, 1.0
    %v1089 = vrcp.pop %v1088
    %v1090 = vmul.f32 1.0, %v1089
    %v1091 = vtanh.pop %v1084
    %v1092 = vxor.u32 %v1084, 2147483648
    %v1093 = vmul.f32 %v1092, 1.442695
    %v1094 = vpow.pop %v1093
    %v1095 = vadd.f32 %v1094, 1.0
    %v1096 = vrcp.pop %v1095
    %v1097 = vmul.f32 1.0, %v1096
    %v1098 = vmul.f32 %v1090, %v999
    %v1099 = vmul.f32 %v1090, %v1091
    %1101 = vrot.lane.b32.xlu0 %v1099, 64
    %v1102 = vpop.permute.xlu0 %1101
    %v1104 = vadd.f32 %v1098, %v1102
    %v1105 = vtanh.pop %v1104
    %v1106 = vmul.f32 %v1097, %v1105
    %s1107 = smul.u32 7, 2
    %s1108 = smul.addr %s1107, 8
    %s1109 = scalar_lea.vmem [#allocation2], %s1108
    %v1110 = vld [vmem:[%s1109] sm:$0xff]
    %v1111 = vld [vmem:[%s1109 + $0x8] sm:$0xff]
    %1113 = vrot.lane.b32.xlu0 %v1106, 64
    %v1114 = vpop.permute.xlu0 %1113
    %v1115 = vsel %vm378, %v1114, 0
    %1117 = vmatprep.subr.mxu0 0.0
    %1118 = vmatpush1.msra.mxu0 0.0
    %1119 = vmatprep.subr.mxu0 0.0
    %1120 = vmatpush1.msra.mxu0 0.0
    %1121 = vmatprep.subr.mxu0 0.0
    %1122 = vmatpush1.msra.mxu0 0.0
    %1123 = vmatprep.subr.mxu0 0.0
    %1124 = vmatpush1.msra.mxu0 0.0
    %1125 = vmatprep.subr.mxu0 0.0
    %1126 = vmatpush1.msra.mxu0 0.0
    %1127 = vmatprep.subr.mxu0 0.0
    %1128 = vmatpush1.msra.mxu0 0.0
    %1129 = vmatprep.subr.mxu0 0.0
    %1130 = vmatpush1.msra.mxu0 0.0
    %1131 = vmatprep.subr.mxu0 0.0
    %1132 = vmatpush1.msra.mxu0 0.0
    %1133 = vmatprep.subr.mxu0 %v67
    %1134 = vmatpush1.msra.mxu0 %v66
    %1135 = vmatprep.subr.mxu0 %v65
    %1136 = vmatpush1.msra.mxu0 %v64
    %1137 = vmatprep.subr.mxu0 %v63
    %1138 = vmatpush1.msra.mxu0 %v62
    %1139 = vmatprep.subr.mxu0 %v61
    %1140 = vmatpush1.msra.mxu0 %v60
    %1141 = vmatprep.subr.mxu0 %v59
    %1142 = vmatpush1.msra.mxu0 %v58
    %1143 = vmatprep.subr.mxu0 %v57
    %1144 = vmatpush1.msra.mxu0 %v56
    %1145 = vmatprep.subr.mxu0 %v55
    %1146 = vmatpush1.msra.mxu0 %v54
    %1147 = vmatprep.subr.mxu0 %v53
    %1148 = vmatpush1.msra.mxu0 %v52
    %1149 = vmatprep.subr.mxu0 0.0
    %1150 = vmatpush2.msra.mxu0 0.0
    %1151 = vmatprep.subr.mxu0 0.0
    %1152 = vmatpush2.msra.mxu0 0.0
    %1153 = vmatprep.subr.mxu0 0.0
    %1154 = vmatpush2.msra.mxu0 0.0
    %1155 = vmatprep.subr.mxu0 0.0
    %1156 = vmatpush2.msra.mxu0 0.0
    %1157 = vmatprep.subr.mxu0 0.0
    %1158 = vmatpush2.msra.mxu0 0.0
    %1159 = vmatprep.subr.mxu0 0.0
    %1160 = vmatpush2.msra.mxu0 0.0
    %1161 = vmatprep.subr.mxu0 0.0
    %1162 = vmatpush2.msra.mxu0 0.0
    %1163 = vmatprep.subr.mxu0 0.0
    %1164 = vmatpush2.msra.mxu0 0.0
    %1165 = vmatprep.subr.mxu0 0.0
    %1166 = vmatpush2.msra.mxu0 0.0
    %1167 = vmatprep.subr.mxu0 0.0
    %1168 = vmatpush2.msra.mxu0 0.0
    %1169 = vmatprep.subr.mxu0 0.0
    %1170 = vmatpush2.msra.mxu0 0.0
    %1171 = vmatprep.subr.mxu0 0.0
    %1172 = vmatpush2.msra.mxu0 0.0
    %1173 = vmatprep.subr.mxu0 0.0
    %1174 = vmatpush2.msra.mxu0 0.0
    %1175 = vmatprep.subr.mxu0 0.0
    %1176 = vmatpush2.msra.mxu0 0.0
    %1177 = vmatprep.subr.mxu0 0.0
    %1178 = vmatpush2.msra.mxu0 0.0
    %1179 = vmatprep.subr.mxu0 0.0
    %1180 = vmatpush2.msra.mxu0 0.0
    %1181 = vmatprep.mubr.f32.mxu0 0.0
    %1182 = vmatmul.mubr.f32.gmra.mxu0 %v1115
    %v1183 = vpop.f32.mrf.mxu0
    %v1184 = vadd.f32 0.0, %v1183
    %v1185 = vpop.f32.mrf.mxu0
    %v1186 = vadd.f32 0.0, %v1185
    %1187 = vdwg.mxu0
    %v1188 = vadd.f32 %v1110, %v1184
    %v1189 = vadd.f32 %v1111, %v1186
    %v1190 = vxor.u32 %v1188, 2147483648
    %v1191 = vmul.f32 %v1190, 1.442695
    %v1192 = vpow.pop %v1191
    %v1193 = vadd.f32 %v1192, 1.0
    %v1194 = vrcp.pop %v1193
    %v1195 = vmul.f32 1.0, %v1194
    %v1196 = vtanh.pop %v1189
    %v1197 = vxor.u32 %v1189, 2147483648
    %v1198 = vmul.f32 %v1197, 1.442695
    %v1199 = vpow.pop %v1198
    %v1200 = vadd.f32 %v1199, 1.0
    %v1201 = vrcp.pop %v1200
    %v1202 = vmul.f32 1.0, %v1201
    %v1203 = vmul.f32 %v1195, %v1104
    %v1204 = vmul.f32 %v1195, %v1196
    %1206 = vrot.lane.b32.xlu0 %v1204, 64
    %v1207 = vpop.permute.xlu0 %1206
    %v1209 = vadd.f32 %v1203, %v1207
    %v1210 = vtanh.pop %v1209
    %v1211 = vmul.f32 %v1202, %v1210
    %1213 = vrot.lane.b32.xlu0 %v1211, 64
    %v1214 = vpop.permute.xlu0 %1213
    %1216 = vst.msk [vmem:[#allocation6] sm:$0xff] %vm378, %v1214
    // Predicated region
    $region26: #{tpu_custom_call.1} parent=1 // pred_check
      _
    $region27: #{tpu_custom_call.1} parent=1 // pred_check_branch
      %1218 = sbr.rel (0) target = $region29
    $region28: #{tpu_custom_call.1} parent=1 // pred_region
      %s1220 = ssub.s32 128, 128
      %1221 = vsyncadd [#allocation5], %s1220
      %s1223 = sshll.u32 [#allocation6], 4
      %s1224 = int_to_ptr.vmem [resolvable:$true] %s1223
      %1226 = dma.vmem_to_hbm [thread:$0]  %s1224, 128, %s5, [#allocation5]
    $region29: #{tpu_custom_call.1} parent=1 // pred_fallthru
      _
    // Predicated region
    $region30: #{tpu_custom_call.1} parent=1 // pred_check
      _
    $region31: #{tpu_custom_call.1} parent=1 // pred_check_branch
      %1228 = sbr.rel (0) target = $region33
    $region32: #{tpu_custom_call.1} parent=1 // pred_region
      %1229 = dma.done [#allocation5], 128
    $region33: #{tpu_custom_call.1} parent=1 // pred_fallthru
      _
    %1230 = vsyncpa [#allocation4], 1
    %1231 = vsyncpa [#allocation5], 1

</llo_original>
